<compile_context>
chip_gen: v5e
topology: v5e:2x2
jax: 0.10.0
libtpu: 0.0.40
codegen_flags: <defaults>
</compile_context>

<pallas_src>
import jax
import jax.numpy as jnp
from jax.experimental import pallas as pl
from jax.experimental.pallas import tpu as pltpu


def agent_id_posenc_kernel(ids_ref, scales_ref, ws_ref, wc_ref, b_ref, out_ref):
    # ids: (tile_n, 1) int32 -> float32 (matches torch `.float()`)
    ids = ids_ref[...].astype(jnp.float32)
    ang = ids * scales_ref[...]                          # (tile_n, F) broadcast
    s = jnp.sin(ang)
    c = jnp.cos(ang)
    # [sin | cos] @ W  ==  sin @ W[:F] + cos @ W[F:]
    out = (
        jnp.dot(s, ws_ref[...], preferred_element_type=jnp.float32)
        + jnp.dot(c, wc_ref[...], preferred_element_type=jnp.float32)
        + b_ref[...]
    )
    out_ref[...] = out.astype(out_ref.dtype)


def agent_id_pos_enc(agent_ids, params, *, num_freqs=8, id_embed_dim=32, tile_n=None):
    """Runs AgentIDPosEnc.forward. agent_ids: integer array of any shape.
    Returns float32 array of shape (*agent_ids.shape, id_embed_dim)."""
    shape_in = agent_ids.shape
    flat = agent_ids.reshape(-1).astype(jnp.int32)
    n = flat.shape[0]

    if tile_n is None:
        # aim for >=2 grid steps (pipelining + v7x megacore), <=512 rows/tile,
        # multiple of 8 for the (8,128) sublane constraint.
        half = -(-n // 2)
        tile_n = min(512, max(8, -(-half // 8) * 8))
    assert tile_n % 8 == 0, "tile_n must be a multiple of 8"

    n_pad = -(-n // tile_n) * tile_n
    if n_pad != n:
        flat = jnp.pad(flat, (0, n_pad - n))
    ids2d = flat.reshape(n_pad, 1)

    w = params["w"]                 # (2*num_freqs, id_embed_dim)  (transposed vs torch)
    b = params["b"]                 # (1, id_embed_dim)
    ws = w[:num_freqs]
    wc = w[num_freqs:]
    # exact powers of two, shared with the reference path
    scales = (2.0 ** jnp.arange(num_freqs, dtype=jnp.float32)).reshape(1, num_freqs)

    grid = (n_pad // tile_n,)

    def rep(shape):                 # full-array block, replicated over the grid
        return pl.BlockSpec(shape, lambda i: (0, 0))

    cost = pl.CostEstimate(
        flops=2 * n_pad * (2 * num_freqs) * id_embed_dim + 2 * n_pad * num_freqs,
        transcendentals=2 * n_pad * num_freqs,
        bytes_accessed=(
            n_pad * 4                                   # ids in
            + n_pad * id_embed_dim * 4                  # embeddings out
            + (2 * num_freqs * id_embed_dim + id_embed_dim + num_freqs) * 4
        ),
    )

    out = pl.pallas_call(
        agent_id_posenc_kernel,
        out_shape=jax.ShapeDtypeStruct((n_pad, id_embed_dim), jnp.float32),
        grid_spec=pltpu.PrefetchScalarGridSpec(
            num_scalar_prefetch=0,
            grid=grid,
            in_specs=[
                pl.BlockSpec((tile_n, 1), lambda i: (i, 0)),      # ids (tiled)
                rep((1, num_freqs)),                              # 2^k scales
                rep((num_freqs, id_embed_dim)),                   # W_sin
                rep((num_freqs, id_embed_dim)),                   # W_cos
                rep((1, id_embed_dim)),                           # bias
            ],
            out_specs=pl.BlockSpec((tile_n, id_embed_dim), lambda i: (i, 0)),
        ),
        compiler_params=pltpu.CompilerParams(
            dimension_semantics=("parallel",),
        ),
        cost_estimate=cost,
    )(ids2d, scales, ws, wc, b)

    out = out[:n]
    # final .view(*shape_in, id_embed_dim) done wrapper-side (free row-major reshape)
    return out.reshape(*shape_in, id_embed_dim)


def init_params(key, num_freqs=8, id_embed_dim=32):
    """Deterministic init mirroring kaiming_normal_(a=0.01) + zero bias.
    Weight stored transposed vs PyTorch, i.e. (2*num_freqs, id_embed_dim)."""
    fan_in = 2 * num_freqs
    gain = (2.0 / (1.0 + 0.01 ** 2)) ** 0.5
    std = gain / (fan_in ** 0.5)
    w = std * jax.random.normal(key, (fan_in, id_embed_dim), jnp.float32)
    b = jnp.zeros((1, id_embed_dim), jnp.float32)
    return {"w": w, "b": b}


def reference_forward(agent_ids, params, num_freqs=8):
    """Pure-JAX reference matching the PyTorch forward."""
    x = agent_ids.reshape(-1).astype(jnp.float32)[:, None]
    scales = (2.0 ** jnp.arange(num_freqs, dtype=jnp.float32))[None, :]
    m = x * scales
    feats = jnp.concatenate([jnp.sin(m), jnp.cos(m)], axis=-1)
    out = jnp.dot(feats, params["w"], precision=jax.lax.Precision.HIGHEST) + params["b"]
    return out.reshape(*agent_ids.shape, -1)


if __name__ == "__main__":
    key = jax.random.PRNGKey(0)
    k_ids, k_w = jax.random.split(key)

    # agent ids laid out as (batch=2, groups=4, agents=16) -> 128 ids total,
    # default tile_n=64 -> grid of 2 steps.
    agent_ids = jax.random.randint(k_ids, (2, 4, 16), 0, 32, dtype=jnp.int32)
    params = init_params(k_w, num_freqs=8, id_embed_dim=32)

    out = agent_id_pos_enc(agent_ids, params, num_freqs=8, id_embed_dim=32)
    jax.block_until_ready(out)

    ref = reference_forward(agent_ids, params, num_freqs=8)
    assert out.shape == (2, 4, 16, 32)
    max_err = float(jnp.max(jnp.abs(out - ref)))
    assert jnp.allclose(out, ref, atol=1e-3, rtol=1e-3), max_err
    print("KERNEL_OK")
</pallas_src>

<mosaic_0001>
module attributes {stable_mosaic.version = 11 : i64} {
  func.func @agent_id_posenc_kernel(%arg0: i32, %arg1: memref<64x1xi32, #tpu.memory_space<vmem>>, %arg2: memref<1x8xf32, #tpu.memory_space<vmem>>, %arg3: memref<8x32xf32, #tpu.memory_space<vmem>>, %arg4: memref<8x32xf32, #tpu.memory_space<vmem>>, %arg5: memref<1x32xf32, #tpu.memory_space<vmem>>, %arg6: memref<64x32xf32, #tpu.memory_space<vmem>>) attributes {dimension_semantics = [#tpu.dimension_semantics<parallel>], iteration_bounds = array<i64: 2>, scalar_prefetch = 0 : i64, scratch_operands = 0 : i64, tpu.core_type = #tpu.core_type<tc>, window_params = [{transform_indices = @transform_0, window_bounds = array<i64: 64, 1>}, {pipeline_mode = #tpu.pipeline_mode<synchronous>, transform_indices = @transform_1, window_bounds = array<i64: 1, 8>}, {pipeline_mode = #tpu.pipeline_mode<synchronous>, transform_indices = @transform_2, window_bounds = array<i64: 8, 32>}, {pipeline_mode = #tpu.pipeline_mode<synchronous>, transform_indices = @transform_3, window_bounds = array<i64: 8, 32>}, {pipeline_mode = #tpu.pipeline_mode<synchronous>, transform_indices = @transform_4, window_bounds = array<i64: 1, 32>}, {transform_indices = @transform_5, window_bounds = array<i64: 64, 32>}]} {
    %c0 = arith.constant 0 : index
    %c0_0 = arith.constant 0 : index
    %0 = vector.load %arg1[%c0, %c0_0] : memref<64x1xi32, #tpu.memory_space<vmem>>, vector<64x1xi32>
    %1 = arith.sitofp %0 : vector<64x1xi32> to vector<64x1xf32>
    %c0_1 = arith.constant 0 : index
    %c0_2 = arith.constant 0 : index
    %2 = vector.load %arg2[%c0_1, %c0_2] : memref<1x8xf32, #tpu.memory_space<vmem>>, vector<1x8xf32>
    %3 = vector.broadcast %1 : vector<64x1xf32> to vector<64x8xf32>
    %4 = vector.broadcast %2 : vector<1x8xf32> to vector<64x8xf32>
    %5 = arith.mulf %3, %4 : vector<64x8xf32>
    %6 = math.sin %5 : vector<64x8xf32>
    %7 = math.cos %5 : vector<64x8xf32>
    %c0_3 = arith.constant 0 : index
    %c0_4 = arith.constant 0 : index
    %8 = vector.load %arg3[%c0_3, %c0_4] : memref<8x32xf32, #tpu.memory_space<vmem>>, vector<8x32xf32>
    %cst = arith.constant dense<0.000000e+00> : vector<64x32xf32>
    %9 = tpu.matmul %6, %8, %cst {dimension_numbers = #tpu.dot_dimension_numbers<[1], [0], [0], [1], [0, 0, 1, 1], [], []>} : vector<64x8xf32>, vector<8x32xf32>, vector<64x32xf32> -> vector<64x32xf32>
    %c0_5 = arith.constant 0 : index
    %c0_6 = arith.constant 0 : index
    %10 = vector.load %arg4[%c0_5, %c0_6] : memref<8x32xf32, #tpu.memory_space<vmem>>, vector<8x32xf32>
    %cst_7 = arith.constant dense<0.000000e+00> : vector<64x32xf32>
    %11 = tpu.matmul %7, %10, %cst_7 {dimension_numbers = #tpu.dot_dimension_numbers<[1], [0], [0], [1], [0, 0, 1, 1], [], []>} : vector<64x8xf32>, vector<8x32xf32>, vector<64x32xf32> -> vector<64x32xf32>
    %12 = arith.addf %9, %11 : vector<64x32xf32>
    %c0_8 = arith.constant 0 : index
    %c0_9 = arith.constant 0 : index
    %13 = vector.load %arg5[%c0_8, %c0_9] : memref<1x32xf32, #tpu.memory_space<vmem>>, vector<1x32xf32>
    %14 = vector.broadcast %13 : vector<1x32xf32> to vector<64x32xf32>
    %15 = arith.addf %12, %14 : vector<64x32xf32>
    %c0_10 = arith.constant 0 : index
    %c0_11 = arith.constant 0 : index
    %16 = vector.load %arg6[%c0_10, %c0_11] : memref<64x32xf32, #tpu.memory_space<vmem>>, vector<64x32xf32>
    tpu.vector_store %arg6[%c0_10, %c0_11], %15 {strides = array<i32>} : memref<64x32xf32, #tpu.memory_space<vmem>>, vector<64x32xf32>,
    return
  }
  func.func @transform_0(%arg0: i32) -> (i32, i32) {
    %c0_i32 = arith.constant 0 : i32
    %c0_i32_0 = arith.constant 0 : i32
    return %arg0, %c0_i32 : i32, i32
  }
  func.func @transform_1(%arg0: i32) -> (i32, i32) {
    %c0_i32 = arith.constant 0 : i32
    %c0_i32_0 = arith.constant 0 : i32
    %c0_i32_1 = arith.constant 0 : i32
    return %c0_i32, %c0_i32_0 : i32, i32
  }
  func.func @transform_2(%arg0: i32) -> (i32, i32) {
    %c0_i32 = arith.constant 0 : i32
    %c0_i32_0 = arith.constant 0 : i32
    %c0_i32_1 = arith.constant 0 : i32
    return %c0_i32, %c0_i32_0 : i32, i32
  }
  func.func @transform_3(%arg0: i32) -> (i32, i32) {
    %c0_i32 = arith.constant 0 : i32
    %c0_i32_0 = arith.constant 0 : i32
    %c0_i32_1 = arith.constant 0 : i32
    return %c0_i32, %c0_i32_0 : i32, i32
  }
  func.func @transform_4(%arg0: i32) -> (i32, i32) {
    %c0_i32 = arith.constant 0 : i32
    %c0_i32_0 = arith.constant 0 : i32
    %c0_i32_1 = arith.constant 0 : i32
    return %c0_i32, %c0_i32_0 : i32, i32
  }
  func.func @transform_5(%arg0: i32) -> (i32, i32) {
    %c0_i32 = arith.constant 0 : i32
    %c0_i32_0 = arith.constant 0 : i32
    return %arg0, %c0_i32 : i32, i32
  }
}

</mosaic_0001>

<llo_original>
// kernel: tpu_custom_call.1
$region0: #{tpu_custom_call.1}
  #allocation0 [shape = 'u32[]', space=smem, size = 0x4, offset = 0x4, fixed_abs, tag = 'smem constant byte address 0x4 - core index']
  #allocation1 [shape = 'u32[72,128]{1,0:T(1,128)}', space=vmem, size = 0x9000, scoped, tag = 'internal scratch']
  %s0 = inlined_call_operand.vmem [shape: s32[128,1], index: 0, kind: input, shape index: {}]
  %s1 = inlined_call_operand.vmem [shape: f32[1,8], index: 1, kind: input, shape index: {}]
  %s2 = inlined_call_operand.vmem [shape: f32[8,32], index: 2, kind: input, shape index: {}]
  %s3 = inlined_call_operand.vmem [shape: f32[8,32], index: 3, kind: input, shape index: {}]
  %s4 = inlined_call_operand.vmem [shape: f32[1,32], index: 4, kind: input, shape index: {}]
  %s5 = inlined_call_operand.vmem [shape: f32[128,32], index: 5, kind: output, shape index: {}]
  %s6 = sld [smem:[#allocation0]]
  $region53: #{tpu_custom_call.1} parent=0
    _
  %s8 = ssub.s32 1, %s6
  %s9 = scalar_select 0, %s8, %s6
  loop: start=0, step=1, limit=4
  $region2: #{tpu_custom_call.1} parent=0 // loop_pre_header
    _
  $region3: #{tpu_custom_call.1} parent=0 // loop_header
    %s11 = sphi 0, %s15
    %p12 = scmp.ge.s32.totalorder %s11, 4
    %s21 = sphi 0, %s23
    %s24 = sphi 0, %s21
    %s25 = sphi 0, %s24
    %s41 = sphi 0, %s25
    %s45 = sphi 0, %s45
    %s47 = sphi 0, %s45
    %s48 = sphi 0, %s47
    %s62 = sphi 0, %s48
    %s66 = sphi 0, %s66
    %s68 = sphi 0, %s66
    %s69 = sphi 0, %s68
    %s83 = sphi 0, %s69
    %s87 = sphi 0, %s87
    %s89 = sphi 0, %s87
    %s90 = sphi 0, %s89
    %s104 = sphi 0, %s90
    %s108 = sphi 0, %s108
    %s110 = sphi 0, %s108
    %s111 = sphi 0, %s110
    %s125 = sphi 0, %s111
    %s131 = sphi 0, %s133
    %s134 = sphi 0, %s131
    %s135 = sphi 0, %s134
    %s151 = sphi 0, %s135
  $region4: #{tpu_custom_call.1} parent=0 // loop_header_branch
    %14 = sbr.rel (%p12) target = $region8
  $region5: #{tpu_custom_call.1} parent=0 // loop_body
    %s16 = ssub.s32 %s11, 1
    %s17 = ssub.s32 %s11, 2
    %s18 = sadd.s32 %s11, 1
    %s19 = ssub.s32 %s11, %s18
    %p20 = scmp.eq.s32.totalorder %s19, 0
    %s22 = sadd.s32 %s21, 1
    %s23 = scalar_select %p20, %s21, %s22
    %p26 = pneg %p20
    %p27 = scmp.eq.s32.totalorder %s11, 1
    %p28 = por %p26, %p27
    %p29 = scmp.ne.s32.totalorder %s21, %s24
    %p30 = scmp.eq.s32.totalorder %s11, 0
    %p31 = por %p29, %p30
    %p32 = scmp.ne.s32.totalorder %s21, %s24
    %p33 = scmp.eq.s32.totalorder %s16, 1
    %p34 = por %p32, %p33
    %p35 = scmp.ne.s32.totalorder %s24, %s25
    %p36 = scmp.eq.s32.totalorder %s16, 0
    %p37 = por %p35, %p36
    %p38 = scmp.ne.s32.totalorder %s24, %s25
    %p39 = scmp.eq.s32.totalorder %s17, 1
    %p40 = por %p38, %p39
    %p42 = scmp.ne.s32.totalorder %s25, %s41
    %p43 = scmp.eq.s32.totalorder %s17, 0
    %p44 = por %p42, %p43
    %s46 = sadd.s32 %s45, 1
    %p49 = scmp.eq.s32.totalorder %s11, 1
    %p50 = scmp.ne.s32.totalorder %s45, %s47
    %p51 = scmp.eq.s32.totalorder %s11, 0
    %p52 = por %p50, %p51
    %p53 = scmp.ne.s32.totalorder %s45, %s47
    %p54 = scmp.eq.s32.totalorder %s16, 1
    %p55 = por %p53, %p54
    %p56 = scmp.ne.s32.totalorder %s47, %s48
    %p57 = scmp.eq.s32.totalorder %s16, 0
    %p58 = por %p56, %p57
    %p59 = scmp.ne.s32.totalorder %s47, %s48
    %p60 = scmp.eq.s32.totalorder %s17, 1
    %p61 = por %p59, %p60
    %p63 = scmp.ne.s32.totalorder %s48, %s62
    %p64 = scmp.eq.s32.totalorder %s17, 0
    %p65 = por %p63, %p64
    %s67 = sadd.s32 %s66, 1
    %p70 = scmp.eq.s32.totalorder %s11, 1
    %p71 = scmp.ne.s32.totalorder %s66, %s68
    %p72 = scmp.eq.s32.totalorder %s11, 0
    %p73 = por %p71, %p72
    %p74 = scmp.ne.s32.totalorder %s66, %s68
    %p75 = scmp.eq.s32.totalorder %s16, 1
    %p76 = por %p74, %p75
    %p77 = scmp.ne.s32.totalorder %s68, %s69
    %p78 = scmp.eq.s32.totalorder %s16, 0
    %p79 = por %p77, %p78
    %p80 = scmp.ne.s32.totalorder %s68, %s69
    %p81 = scmp.eq.s32.totalorder %s17, 1
    %p82 = por %p80, %p81
    %p84 = scmp.ne.s32.totalorder %s69, %s83
    %p85 = scmp.eq.s32.totalorder %s17, 0
    %p86 = por %p84, %p85
    %s88 = sadd.s32 %s87, 1
    %p91 = scmp.eq.s32.totalorder %s11, 1
    %p92 = scmp.ne.s32.totalorder %s87, %s89
    %p93 = scmp.eq.s32.totalorder %s11, 0
    %p94 = por %p92, %p93
    %p95 = scmp.ne.s32.totalorder %s87, %s89
    %p96 = scmp.eq.s32.totalorder %s16, 1
    %p97 = por %p95, %p96
    %p98 = scmp.ne.s32.totalorder %s89, %s90
    %p99 = scmp.eq.s32.totalorder %s16, 0
    %p100 = por %p98, %p99
    %p101 = scmp.ne.s32.totalorder %s89, %s90
    %p102 = scmp.eq.s32.totalorder %s17, 1
    %p103 = por %p101, %p102
    %p105 = scmp.ne.s32.totalorder %s90, %s104
    %p106 = scmp.eq.s32.totalorder %s17, 0
    %p107 = por %p105, %p106
    %s109 = sadd.s32 %s108, 1
    %p112 = scmp.eq.s32.totalorder %s11, 1
    %p113 = scmp.ne.s32.totalorder %s108, %s110
    %p114 = scmp.eq.s32.totalorder %s11, 0
    %p115 = por %p113, %p114
    %p116 = scmp.ne.s32.totalorder %s108, %s110
    %p117 = scmp.eq.s32.totalorder %s16, 1
    %p118 = por %p116, %p117
    %p119 = scmp.ne.s32.totalorder %s110, %s111
    %p120 = scmp.eq.s32.totalorder %s16, 0
    %p121 = por %p119, %p120
    %p122 = scmp.ne.s32.totalorder %s110, %s111
    %p123 = scmp.eq.s32.totalorder %s17, 1
    %p124 = por %p122, %p123
    %p126 = scmp.ne.s32.totalorder %s111, %s125
    %p127 = scmp.eq.s32.totalorder %s17, 0
    %p128 = por %p126, %p127
    %s129 = ssub.s32 %s11, %s18
    %p130 = scmp.eq.s32.totalorder %s129, 0
    %s132 = sadd.s32 %s131, 1
    %s133 = scalar_select %p130, %s131, %s132
    %p136 = pneg %p130
    %p137 = scmp.eq.s32.totalorder %s11, 1
    %p138 = por %p136, %p137
    %p139 = scmp.ne.s32.totalorder %s131, %s134
    %p140 = scmp.eq.s32.totalorder %s11, 0
    %p141 = por %p139, %p140
    %p142 = scmp.ne.s32.totalorder %s131, %s134
    %p143 = scmp.eq.s32.totalorder %s16, 1
    %p144 = por %p142, %p143
    %p145 = scmp.ne.s32.totalorder %s134, %s135
    %p146 = scmp.eq.s32.totalorder %s16, 0
    %p147 = por %p145, %p146
    %p148 = scmp.ne.s32.totalorder %s134, %s135
    %p149 = scmp.eq.s32.totalorder %s17, 1
    %p150 = por %p148, %p149
    %p152 = scmp.ne.s32.totalorder %s135, %s151
    %p153 = scmp.eq.s32.totalorder %s17, 0
    %p154 = por %p152, %p153
    %p155 = scmp.le.s32.totalorder 1, %s11
    %p156 = scmp.lt.s32.totalorder %s11, 3
    %p157 = pnand %p155, %p156
    %p158 = pneg %p157
    // Predicated region
    $region9: #{tpu_custom_call.1} parent=5 // pred_check
      _
    $region10: #{tpu_custom_call.1} parent=5 // pred_check_branch
      %160 = sbr.rel (%p157) target = $region12
    $region11: #{tpu_custom_call.1} parent=5 // pred_region
      %s161 = ssub.s32 %s11, 1
      // Predicated region
      $region13: #{tpu_custom_call.1} parent=11 // pred_check
        %p162 = pneg %p58
      $region14: #{tpu_custom_call.1} parent=11 // pred_check_branch
        %164 = sbr.rel (%p162) target = $region16
      $region15: #{tpu_custom_call.1} parent=11 // pred_region
        _
      $region16: #{tpu_custom_call.1} parent=11 // pred_fallthru
        _
      // Predicated region
      $region17: #{tpu_custom_call.1} parent=11 // pred_check
        %p165 = pneg %p79
      $region18: #{tpu_custom_call.1} parent=11 // pred_check_branch
        %167 = sbr.rel (%p165) target = $region20
      $region19: #{tpu_custom_call.1} parent=11 // pred_region
        _
      $region20: #{tpu_custom_call.1} parent=11 // pred_fallthru
        _
      // Predicated region
      $region21: #{tpu_custom_call.1} parent=11 // pred_check
        %p168 = pneg %p100
      $region22: #{tpu_custom_call.1} parent=11 // pred_check_branch
        %170 = sbr.rel (%p168) target = $region24
      $region23: #{tpu_custom_call.1} parent=11 // pred_region
        _
      $region24: #{tpu_custom_call.1} parent=11 // pred_fallthru
        _
      // Predicated region
      $region25: #{tpu_custom_call.1} parent=11 // pred_check
        %p171 = pneg %p121
      $region26: #{tpu_custom_call.1} parent=11 // pred_check_branch
        %173 = sbr.rel (%p171) target = $region28
      $region27: #{tpu_custom_call.1} parent=11 // pred_region
        _
      $region28: #{tpu_custom_call.1} parent=11 // pred_fallthru
        _
    $region12: #{tpu_custom_call.1} parent=5 // pred_fallthru
      _
    %p174 = scmp.lt.s32.totalorder %s11, 2
    // Predicated region
    $region29: #{tpu_custom_call.1} parent=5 // pred_check
      %p175 = pneg %p174
    $region30: #{tpu_custom_call.1} parent=5 // pred_check_branch
      %177 = sbr.rel (%p175) target = $region32
    $region31: #{tpu_custom_call.1} parent=5 // pred_region
      // Predicated region
      $region33: #{tpu_custom_call.1} parent=31 // pred_check
        %p178 = pneg %p31
      $region34: #{tpu_custom_call.1} parent=31 // pred_check_branch
        %180 = sbr.rel (%p178) target = $region36
      $region35: #{tpu_custom_call.1} parent=31 // pred_region
        %s181 = smul.u32 8, %s11
        %p182 = scmp.lt.s32.totalorder %s181, 15
        %s183 = scalar_select %p182, %s181, 15
        %s184 = smul.addr %s183, 8
        %s185 = scalar_lea.vmem %s0, %s184
        %s186 = smul.u32 8, %s11
      $region36: #{tpu_custom_call.1} parent=31 // pred_fallthru
        _
    $region32: #{tpu_custom_call.1} parent=5 // pred_fallthru
      _
    %p187 = scmp.le.s32.totalorder 1, %s11
    %p188 = scmp.lt.s32.totalorder %s11, 3
    %p189 = pnand %p187, %p188
    %p190 = pneg %p189
    // Predicated region
    $region37: #{tpu_custom_call.1} parent=5 // pred_check
      _
    $region38: #{tpu_custom_call.1} parent=5 // pred_check_branch
      %192 = sbr.rel (%p189) target = $region40
    $region39: #{tpu_custom_call.1} parent=5 // pred_region
      %s193 = ssub.s32 %s11, 1
      %s194 = smul.u32 8, %s16
      %p195 = scmp.lt.s32.totalorder %s194, 15
      %s196 = scalar_select %p195, %s194, 15
      %s197 = smul.addr %s196, 8
      %s198 = scalar_lea.vmem %s0, %s197
      %p199 = pneg %p37
      %p200 = pneg %p34
      %p201 = pneg %p58
      %p202 = pneg %p55
      %p203 = pneg %p79
      %p204 = pneg %p76
      %p205 = pneg %p100
      %p206 = pneg %p97
      %p207 = pneg %p121
      %p208 = pneg %p118
      %p209 = pneg %p147
      %p210 = pneg %p144
      %s211 = smul.u32 8, %s16
      %p212 = scmp.lt.s32.totalorder %s211, 15
      %s213 = scalar_select %p212, %s211, 15
      %s214 = smul.addr %s213, 8
      %s215 = scalar_lea.vmem %s5, %s214
      %s216 = smul.u32 8, %s16
      %p217 = scmp.lt.s32.totalorder %s216, 15
      %s218 = scalar_select %p217, %s216, 15
      %s219 = smul.addr %s218, 8
      %s220 = scalar_lea.vmem %s0, %s219
      %s221 = smul.u32 8, %s16
      %s222 = smul.u32 8, %s16
      %p223 = scmp.lt.s32.totalorder %s222, 15
      %s224 = scalar_select %p223, %s222, 15
      %s225 = smul.addr %s224, 8
      %s226 = scalar_lea.vmem %s5, %s225
      %s227 = smul.u32 8, %s16
      %v228 = vld [vmem:[%s220] sm:$0xff]
      %v229 = vld [vmem:[%s220 + $0x8] sm:$0xff]
      %v230 = vld [vmem:[%s220 + $0x10] sm:$0xff]
      %v231 = vld [vmem:[%s220 + $0x18] sm:$0xff]
      %v232 = vld [vmem:[%s220 + $0x20] sm:$0xff]
      %v233 = vld [vmem:[%s220 + $0x28] sm:$0xff]
      %v234 = vld [vmem:[%s220 + $0x30] sm:$0xff]
      %v235 = vld [vmem:[%s220 + $0x38] sm:$0xff]
      %v236 = vcvt.s32.f32 %v228
      %v237 = vcvt.s32.f32 %v229
      %v238 = vcvt.s32.f32 %v230
      %v239 = vcvt.s32.f32 %v231
      %v240 = vcvt.s32.f32 %v232
      %v241 = vcvt.s32.f32 %v233
      %v242 = vcvt.s32.f32 %v234
      %v243 = vcvt.s32.f32 %v235
      %v244 = vld [vmem:[%s1] sm:$0x1]
      %246 = vset.pattern.permute.xlu0 0
      %247 = vperm.xlu0 %246, %v236
      %v248 = vpop.permute.xlu0 %247
      %251 = vset.pattern.permute.xlu0 0
      %252 = vperm.xlu0 %251, %v237
      %v253 = vpop.permute.xlu0 %252
      %256 = vset.pattern.permute.xlu0 0
      %257 = vperm.xlu0 %256, %v238
      %v258 = vpop.permute.xlu0 %257
      %261 = vset.pattern.permute.xlu0 0
      %262 = vperm.xlu0 %261, %v239
      %v263 = vpop.permute.xlu0 %262
      %266 = vset.pattern.permute.xlu0 0
      %267 = vperm.xlu0 %266, %v240
      %v268 = vpop.permute.xlu0 %267
      %271 = vset.pattern.permute.xlu0 0
      %272 = vperm.xlu0 %271, %v241
      %v273 = vpop.permute.xlu0 %272
      %276 = vset.pattern.permute.xlu0 0
      %277 = vperm.xlu0 %276, %v242
      %v278 = vpop.permute.xlu0 %277
      %281 = vset.pattern.permute.xlu0 0
      %282 = vperm.xlu0 %281, %v243
      %v283 = vpop.permute.xlu0 %282
      %v286 = vperm.slane %v244, 0
      %v288 = vmul.f32 %v248, %v286
      %v289 = vmul.f32 %v253, %v286
      %v290 = vmul.f32 %v258, %v286
      %v291 = vmul.f32 %v263, %v286
      %v292 = vmul.f32 %v268, %v286
      %v293 = vmul.f32 %v273, %v286
      %v294 = vmul.f32 %v278, %v286
      %v295 = vmul.f32 %v283, %v286
      %v296 = vand.u32 2147483647, %v288
      %vm297 = vcmp.le.f32.partialorder %v296, 0.7853982
      %vm298 = vcmp.lt.s32.totalorder %v288, 0
      %v299 = vand.u32 %v288, 2139095040
      %v300 = vshrl.u32 %v299, 23
      %v301 = vsub.s32 %v300, 127
      %v302 = vand.u32 2147483647, %v288
      %v303 = vand.u32 %v302, 8388607
      %v304 = vor.u32 %v303, 8388608
      %v305 = vsub.s32 0, %v304
      %v306 = vadd.s32 %v301, 1
      %vm307 = vcmp.gt.s32.totalorder %v306, 0
      %v308 = vsel %vm307, %v306, 0
      %v309 = vshrl.u32 %v308, 5
      %v310 = vand.u32 %v308, 31
      %v311 = vsub.s32 32, %v310
      %v312 = vshrl.u32 683565275, %v311
      %v313 = vshll.u32 683565275, %v310
      %v314 = vshrl.u32 2475754826, %v311
      %v315 = vor.u32 %v313, %v314
      %v316 = vshll.u32 2475754826, %v310
      %v317 = vshrl.u32 2131351028, %v311
      %v318 = vor.u32 %v316, %v317
      %v319 = vshll.u32 2131351028, %v310
      %v320 = vshrl.u32 2102212464, %v311
      %v321 = vor.u32 %v319, %v320
      %v322 = vshll.u32 2102212464, %v310
      %v323 = vshrl.u32 920167782, %v311
      %v324 = vor.u32 %v322, %v323
      %v325 = vshll.u32 920167782, %v310
      %v326 = vshrl.u32 1326507024, %v311
      %v327 = vor.u32 %v325, %v326
      %vm328 = vcmp.lt.s32.totalorder %v309, 1
      %vm329 = vcmp.lt.s32.totalorder %v309, 2
      %vm330 = vcmp.lt.s32.totalorder %v309, 3
      %vm331 = vcmp.lt.s32.totalorder %v309, 4
      %v332 = vsel %vm328, %v312, %v315
      %v333 = vsel %vm331, %v321, 2102212464
      %v334 = vsel %vm330, %v318, %v333
      %v335 = vsel %vm329, %v332, %v334
      %v336 = vsel %vm328, %v315, %v318
      %v337 = vsel %vm331, %v324, 920167782
      %v338 = vsel %vm330, %v321, %v337
      %v339 = vsel %vm329, %v336, %v338
      %v340 = vsel %vm328, %v318, %v321
      %v341 = vsel %vm331, %v327, 1326507024
      %v342 = vsel %vm330, %v324, %v341
      %v343 = vsel %vm329, %v340, %v342
      %v344 = vshll.u32 %v304, 8
      %v345 = vand.u32 %v344, 65535
      %v346 = vshrl.u32 %v344, 16
      %v347 = vand.u32 %v343, 65535
      %v348 = vshrl.u32 %v343, 16
      %v349 = vmul.u32 %v345, %v347
      %v350 = vmul.u32 %v345, %v348
      %v351 = vmul.u32 %v346, %v347
      %v352 = vmul.u32 %v346, %v348
      %v353 = vshll.u32 %v350, 16
      %v354 = vshrl.u32 %v350, 16
      %v355 = vshll.u32 %v351, 16
      %v356 = vshrl.u32 %v351, 16
      %vm357 = vc.u32 %v349, %v353
      %v358 = vsel %vm357, 1, 0
      %v359 = vadd.s32 %v349, %v353
      %v360 = vadd.s32 %v352, %v358
      %vm361 = vc.u32 %v359, %v355
      %v362 = vsel %vm361, 1, 0
      %v363 = vadd.s32 %v359, %v355
      %v364 = vadd.s32 %v360, %v362
      %v365 = vadd.s32 %v364, %v354
      %v366 = vadd.s32 %v365, %v356
      %v367 = vand.u32 %v344, 65535
      %v368 = vshrl.u32 %v344, 16
      %v369 = vand.u32 %v339, 65535
      %v370 = vshrl.u32 %v339, 16
      %v371 = vmul.u32 %v367, %v369
      %v372 = vmul.u32 %v367, %v370
      %v373 = vmul.u32 %v368, %v369
      %v374 = vmul.u32 %v368, %v370
      %v375 = vshll.u32 %v372, 16
      %v376 = vshrl.u32 %v372, 16
      %v377 = vshll.u32 %v373, 16
      %v378 = vshrl.u32 %v373, 16
      %vm379 = vc.u32 %v371, %v375
      %v380 = vsel %vm379, 1, 0
      %v381 = vadd.s32 %v371, %v375
      %v382 = vadd.s32 %v374, %v380
      %vm383 = vc.u32 %v381, %v377
      %v384 = vsel %vm383, 1, 0
      %v385 = vadd.s32 %v381, %v377
      %v386 = vadd.s32 %v382, %v384
      %v387 = vadd.s32 %v386, %v376
      %v388 = vadd.s32 %v387, %v378
      %v389 = vmul.u32 %v344, %v335
      %v390 = vadd.s32 %v366, %v385
      %vm391 = vc.u32 %v366, %v385
      %v392 = vadd.s32 %v388, 1
      %v393 = vsel %vm391, %v392, %v388
      %v394 = vadd.s32 %v389, %v393
      %v395 = vadd.s32 %v394, 536870912
      %v396 = vshrl.u32 %v395, 30
      %v397 = vshll.u32 %v396, 30
      %v398 = vsub.s32 %v394, %v397
      %vm399 = vcmp.lt.s32.totalorder %v398, 0
      %v400 = vsub.s32 0, %v398
      %v401 = vsel %vm399, %v400, %v398
      %v402 = vclz %v401
      %v403 = vsub.s32 %v402, 2
      %vm404 = vcmp.gt.s32.totalorder 0, %v403
      %v405 = vsel %vm404, 0, %v403
      %v406 = vsub.s32 32, %v405
      %v407 = vshll.u32 %v398, %v405
      %v408 = vshrl.u32 %v390, %v406
      %v409 = vor.u32 %v407, %v408
      %v410 = vsub.s32 4294967266, %v405
      %v411 = vadd.s32 %v410, 127
      %v412 = vshll.u32 %v411, 23
      %v413 = vor.u32 4788187, %v412
      %v414 = vand.u32 2147483647, %v413
      %v416 = vcvt.s32.f32 %v409
      %v417 = vmul.f32 %v416, %v414
      %v418 = vxor.u32 %v417, 2147483648
      %v419 = vsel %vm298, %v418, %v417
      %v420 = vsub.s32 4, %v396
      %v421 = vsel %vm298, %v420, %v396
      %v422 = vsel %vm297, %v288, %v419
      %v423 = vsel %vm297, 0, %v421
      %v424 = vmul.f32 %v422, %v422
      %v425 = vmul.f32 %v424, -0.001358992
      %v426 = vadd.f32 %v425, 0.041655596
      %v427 = vmul.f32 %v424, %v426
      %v428 = vadd.f32 %v427, -0.4999988
      %v429 = vmul.f32 %v424, %v428
      %v430 = vadd.f32 1.0, %v429
      %v431 = vmul.f32 %v422, %v422
      %v432 = vmul.f32 %v431, -0.00019511016
      %v433 = vadd.f32 %v432, 0.008332121
      %v434 = vmul.f32 %v431, %v433
      %v435 = vadd.f32 %v434, -0.16666654
      %v436 = vmul.f32 %v431, %v435
      %v437 = vadd.f32 %v436, 1.0
      %v438 = vmul.f32 %v437, %v422
      %vm439 = vweird.f32 %v288
      %v440 = vadd.s32 %v423, 3
      %v441 = vand.u32 %v440, 3
      %vm442 = vcmp.lt.s32.totalorder %v441, 2
      %vm443 = vcmp.eq.s32.totalorder %v441, 0
      %v444 = vxor.u32 %v438, 2147483648
      %v445 = vsel %vm443, %v430, %v444
      %vm446 = vcmp.eq.s32.totalorder %v441, 2
      %v447 = vxor.u32 %v430, 2147483648
      %v448 = vsel %vm446, %v447, %v438
      %v449 = vsel %vm442, %v445, %v448
      %v450 = vsel %vm439, nan, %v449
      %v451 = vand.u32 2147483647, %v289
      %vm452 = vcmp.le.f32.partialorder %v451, 0.7853982
      %vm453 = vcmp.lt.s32.totalorder %v289, 0
      %v454 = vand.u32 %v289, 2139095040
      %v455 = vshrl.u32 %v454, 23
      %v456 = vsub.s32 %v455, 127
      %v457 = vand.u32 2147483647, %v289
      %v458 = vand.u32 %v457, 8388607
      %v459 = vor.u32 %v458, 8388608
      %v460 = vsub.s32 0, %v459
      %v461 = vadd.s32 %v456, 1
      %vm462 = vcmp.gt.s32.totalorder %v461, 0
      %v463 = vsel %vm462, %v461, 0
      %v464 = vshrl.u32 %v463, 5
      %v465 = vand.u32 %v463, 31
      %v466 = vsub.s32 32, %v465
      %v467 = vshrl.u32 683565275, %v466
      %v468 = vshll.u32 683565275, %v465
      %v469 = vshrl.u32 2475754826, %v466
      %v470 = vor.u32 %v468, %v469
      %v471 = vshll.u32 2475754826, %v465
      %v472 = vshrl.u32 2131351028, %v466
      %v473 = vor.u32 %v471, %v472
      %v474 = vshll.u32 2131351028, %v465
      %v475 = vshrl.u32 2102212464, %v466
      %v476 = vor.u32 %v474, %v475
      %v477 = vshll.u32 2102212464, %v465
      %v478 = vshrl.u32 920167782, %v466
      %v479 = vor.u32 %v477, %v478
      %v480 = vshll.u32 920167782, %v465
      %v481 = vshrl.u32 1326507024, %v466
      %v482 = vor.u32 %v480, %v481
      %vm483 = vcmp.lt.s32.totalorder %v464, 1
      %vm484 = vcmp.lt.s32.totalorder %v464, 2
      %vm485 = vcmp.lt.s32.totalorder %v464, 3
      %vm486 = vcmp.lt.s32.totalorder %v464, 4
      %v487 = vsel %vm483, %v467, %v470
      %v488 = vsel %vm486, %v476, 2102212464
      %v489 = vsel %vm485, %v473, %v488
      %v490 = vsel %vm484, %v487, %v489
      %v491 = vsel %vm483, %v470, %v473
      %v492 = vsel %vm486, %v479, 920167782
      %v493 = vsel %vm485, %v476, %v492
      %v494 = vsel %vm484, %v491, %v493
      %v495 = vsel %vm483, %v473, %v476
      %v496 = vsel %vm486, %v482, 1326507024
      %v497 = vsel %vm485, %v479, %v496
      %v498 = vsel %vm484, %v495, %v497
      %v499 = vshll.u32 %v459, 8
      %v500 = vand.u32 %v499, 65535
      %v501 = vshrl.u32 %v499, 16
      %v502 = vand.u32 %v498, 65535
      %v503 = vshrl.u32 %v498, 16
      %v504 = vmul.u32 %v500, %v502
      %v505 = vmul.u32 %v500, %v503
      %v506 = vmul.u32 %v501, %v502
      %v507 = vmul.u32 %v501, %v503
      %v508 = vshll.u32 %v505, 16
      %v509 = vshrl.u32 %v505, 16
      %v510 = vshll.u32 %v506, 16
      %v511 = vshrl.u32 %v506, 16
      %vm512 = vc.u32 %v504, %v508
      %v513 = vsel %vm512, 1, 0
      %v514 = vadd.s32 %v504, %v508
      %v515 = vadd.s32 %v507, %v513
      %vm516 = vc.u32 %v514, %v510
      %v517 = vsel %vm516, 1, 0
      %v518 = vadd.s32 %v514, %v510
      %v519 = vadd.s32 %v515, %v517
      %v520 = vadd.s32 %v519, %v509
      %v521 = vadd.s32 %v520, %v511
      %v522 = vand.u32 %v499, 65535
      %v523 = vshrl.u32 %v499, 16
      %v524 = vand.u32 %v494, 65535
      %v525 = vshrl.u32 %v494, 16
      %v526 = vmul.u32 %v522, %v524
      %v527 = vmul.u32 %v522, %v525
      %v528 = vmul.u32 %v523, %v524
      %v529 = vmul.u32 %v523, %v525
      %v530 = vshll.u32 %v527, 16
      %v531 = vshrl.u32 %v527, 16
      %v532 = vshll.u32 %v528, 16
      %v533 = vshrl.u32 %v528, 16
      %vm534 = vc.u32 %v526, %v530
      %v535 = vsel %vm534, 1, 0
      %v536 = vadd.s32 %v526, %v530
      %v537 = vadd.s32 %v529, %v535
      %vm538 = vc.u32 %v536, %v532
      %v539 = vsel %vm538, 1, 0
      %v540 = vadd.s32 %v536, %v532
      %v541 = vadd.s32 %v537, %v539
      %v542 = vadd.s32 %v541, %v531
      %v543 = vadd.s32 %v542, %v533
      %v544 = vmul.u32 %v499, %v490
      %v545 = vadd.s32 %v521, %v540
      %vm546 = vc.u32 %v521, %v540
      %v547 = vadd.s32 %v543, 1
      %v548 = vsel %vm546, %v547, %v543
      %v549 = vadd.s32 %v544, %v548
      %v550 = vadd.s32 %v549, 536870912
      %v551 = vshrl.u32 %v550, 30
      %v552 = vshll.u32 %v551, 30
      %v553 = vsub.s32 %v549, %v552
      %vm554 = vcmp.lt.s32.totalorder %v553, 0
      %v555 = vsub.s32 0, %v553
      %v556 = vsel %vm554, %v555, %v553
      %v557 = vclz %v556
      %v558 = vsub.s32 %v557, 2
      %vm559 = vcmp.gt.s32.totalorder 0, %v558
      %v560 = vsel %vm559, 0, %v558
      %v561 = vsub.s32 32, %v560
      %v562 = vshll.u32 %v553, %v560
      %v563 = vshrl.u32 %v545, %v561
      %v564 = vor.u32 %v562, %v563
      %v565 = vsub.s32 4294967266, %v560
      %v566 = vadd.s32 %v565, 127
      %v567 = vshll.u32 %v566, 23
      %v568 = vor.u32 4788187, %v567
      %v569 = vand.u32 2147483647, %v568
      %v571 = vcvt.s32.f32 %v564
      %v572 = vmul.f32 %v571, %v569
      %v573 = vxor.u32 %v572, 2147483648
      %v574 = vsel %vm453, %v573, %v572
      %v575 = vsub.s32 4, %v551
      %v576 = vsel %vm453, %v575, %v551
      %v577 = vsel %vm452, %v289, %v574
      %v578 = vsel %vm452, 0, %v576
      %v579 = vmul.f32 %v577, %v577
      %v580 = vmul.f32 %v579, -0.001358992
      %v581 = vadd.f32 %v580, 0.041655596
      %v582 = vmul.f32 %v579, %v581
      %v583 = vadd.f32 %v582, -0.4999988
      %v584 = vmul.f32 %v579, %v583
      %v585 = vadd.f32 1.0, %v584
      %v586 = vmul.f32 %v577, %v577
      %v587 = vmul.f32 %v586, -0.00019511016
      %v588 = vadd.f32 %v587, 0.008332121
      %v589 = vmul.f32 %v586, %v588
      %v590 = vadd.f32 %v589, -0.16666654
      %v591 = vmul.f32 %v586, %v590
      %v592 = vadd.f32 %v591, 1.0
      %v593 = vmul.f32 %v592, %v577
      %vm594 = vweird.f32 %v289
      %v595 = vadd.s32 %v578, 3
      %v596 = vand.u32 %v595, 3
      %vm597 = vcmp.lt.s32.totalorder %v596, 2
      %vm598 = vcmp.eq.s32.totalorder %v596, 0
      %v599 = vxor.u32 %v593, 2147483648
      %v600 = vsel %vm598, %v585, %v599
      %vm601 = vcmp.eq.s32.totalorder %v596, 2
      %v602 = vxor.u32 %v585, 2147483648
      %v603 = vsel %vm601, %v602, %v593
      %v604 = vsel %vm597, %v600, %v603
      %v605 = vsel %vm594, nan, %v604
      %v606 = vand.u32 2147483647, %v290
      %vm607 = vcmp.le.f32.partialorder %v606, 0.7853982
      %vm608 = vcmp.lt.s32.totalorder %v290, 0
      %v609 = vand.u32 %v290, 2139095040
      %v610 = vshrl.u32 %v609, 23
      %v611 = vsub.s32 %v610, 127
      %v612 = vand.u32 2147483647, %v290
      %v613 = vand.u32 %v612, 8388607
      %v614 = vor.u32 %v613, 8388608
      %v615 = vsub.s32 0, %v614
      %v616 = vadd.s32 %v611, 1
      %vm617 = vcmp.gt.s32.totalorder %v616, 0
      %v618 = vsel %vm617, %v616, 0
      %v619 = vshrl.u32 %v618, 5
      %v620 = vand.u32 %v618, 31
      %v621 = vsub.s32 32, %v620
      %v622 = vshrl.u32 683565275, %v621
      %v623 = vshll.u32 683565275, %v620
      %v624 = vshrl.u32 2475754826, %v621
      %v625 = vor.u32 %v623, %v624
      %v626 = vshll.u32 2475754826, %v620
      %v627 = vshrl.u32 2131351028, %v621
      %v628 = vor.u32 %v626, %v627
      %v629 = vshll.u32 2131351028, %v620
      %v630 = vshrl.u32 2102212464, %v621
      %v631 = vor.u32 %v629, %v630
      %v632 = vshll.u32 2102212464, %v620
      %v633 = vshrl.u32 920167782, %v621
      %v634 = vor.u32 %v632, %v633
      %v635 = vshll.u32 920167782, %v620
      %v636 = vshrl.u32 1326507024, %v621
      %v637 = vor.u32 %v635, %v636
      %vm638 = vcmp.lt.s32.totalorder %v619, 1
      %vm639 = vcmp.lt.s32.totalorder %v619, 2
      %vm640 = vcmp.lt.s32.totalorder %v619, 3
      %vm641 = vcmp.lt.s32.totalorder %v619, 4
      %v642 = vsel %vm638, %v622, %v625
      %v643 = vsel %vm641, %v631, 2102212464
      %v644 = vsel %vm640, %v628, %v643
      %v645 = vsel %vm639, %v642, %v644
      %v646 = vsel %vm638, %v625, %v628
      %v647 = vsel %vm641, %v634, 920167782
      %v648 = vsel %vm640, %v631, %v647
      %v649 = vsel %vm639, %v646, %v648
      %v650 = vsel %vm638, %v628, %v631
      %v651 = vsel %vm641, %v637, 1326507024
      %v652 = vsel %vm640, %v634, %v651
      %v653 = vsel %vm639, %v650, %v652
      %v654 = vshll.u32 %v614, 8
      %v655 = vand.u32 %v654, 65535
      %v656 = vshrl.u32 %v654, 16
      %v657 = vand.u32 %v653, 65535
      %v658 = vshrl.u32 %v653, 16
      %v659 = vmul.u32 %v655, %v657
      %v660 = vmul.u32 %v655, %v658
      %v661 = vmul.u32 %v656, %v657
      %v662 = vmul.u32 %v656, %v658
      %v663 = vshll.u32 %v660, 16
      %v664 = vshrl.u32 %v660, 16
      %v665 = vshll.u32 %v661, 16
      %v666 = vshrl.u32 %v661, 16
      %vm667 = vc.u32 %v659, %v663
      %v668 = vsel %vm667, 1, 0
      %v669 = vadd.s32 %v659, %v663
      %v670 = vadd.s32 %v662, %v668
      %vm671 = vc.u32 %v669, %v665
      %v672 = vsel %vm671, 1, 0
      %v673 = vadd.s32 %v669, %v665
      %v674 = vadd.s32 %v670, %v672
      %v675 = vadd.s32 %v674, %v664
      %v676 = vadd.s32 %v675, %v666
      %v677 = vand.u32 %v654, 65535
      %v678 = vshrl.u32 %v654, 16
      %v679 = vand.u32 %v649, 65535
      %v680 = vshrl.u32 %v649, 16
      %v681 = vmul.u32 %v677, %v679
      %v682 = vmul.u32 %v677, %v680
      %v683 = vmul.u32 %v678, %v679
      %v684 = vmul.u32 %v678, %v680
      %v685 = vshll.u32 %v682, 16
      %v686 = vshrl.u32 %v682, 16
      %v687 = vshll.u32 %v683, 16
      %v688 = vshrl.u32 %v683, 16
      %vm689 = vc.u32 %v681, %v685
      %v690 = vsel %vm689, 1, 0
      %v691 = vadd.s32 %v681, %v685
      %v692 = vadd.s32 %v684, %v690
      %vm693 = vc.u32 %v691, %v687
      %v694 = vsel %vm693, 1, 0
      %v695 = vadd.s32 %v691, %v687
      %v696 = vadd.s32 %v692, %v694
      %v697 = vadd.s32 %v696, %v686
      %v698 = vadd.s32 %v697, %v688
      %v699 = vmul.u32 %v654, %v645
      %v700 = vadd.s32 %v676, %v695
      %vm701 = vc.u32 %v676, %v695
      %v702 = vadd.s32 %v698, 1
      %v703 = vsel %vm701, %v702, %v698
      %v704 = vadd.s32 %v699, %v703
      %v705 = vadd.s32 %v704, 536870912
      %v706 = vshrl.u32 %v705, 30
      %v707 = vshll.u32 %v706, 30
      %v708 = vsub.s32 %v704, %v707
      %vm709 = vcmp.lt.s32.totalorder %v708, 0
      %v710 = vsub.s32 0, %v708
      %v711 = vsel %vm709, %v710, %v708
      %v712 = vclz %v711
      %v713 = vsub.s32 %v712, 2
      %vm714 = vcmp.gt.s32.totalorder 0, %v713
      %v715 = vsel %vm714, 0, %v713
      %v716 = vsub.s32 32, %v715
      %v717 = vshll.u32 %v708, %v715
      %v718 = vshrl.u32 %v700, %v716
      %v719 = vor.u32 %v717, %v718
      %v720 = vsub.s32 4294967266, %v715
      %v721 = vadd.s32 %v720, 127
      %v722 = vshll.u32 %v721, 23
      %v723 = vor.u32 4788187, %v722
      %v724 = vand.u32 2147483647, %v723
      %v726 = vcvt.s32.f32 %v719
      %v727 = vmul.f32 %v726, %v724
      %v728 = vxor.u32 %v727, 2147483648
      %v729 = vsel %vm608, %v728, %v727
      %v730 = vsub.s32 4, %v706
      %v731 = vsel %vm608, %v730, %v706
      %v732 = vsel %vm607, %v290, %v729
      %v733 = vsel %vm607, 0, %v731
      %v734 = vmul.f32 %v732, %v732
      %v735 = vmul.f32 %v734, -0.001358992
      %v736 = vadd.f32 %v735, 0.041655596
      %v737 = vmul.f32 %v734, %v736
      %v738 = vadd.f32 %v737, -0.4999988
      %v739 = vmul.f32 %v734, %v738
      %v740 = vadd.f32 1.0, %v739
      %v741 = vmul.f32 %v732, %v732
      %v742 = vmul.f32 %v741, -0.00019511016
      %v743 = vadd.f32 %v742, 0.008332121
      %v744 = vmul.f32 %v741, %v743
      %v745 = vadd.f32 %v744, -0.16666654
      %v746 = vmul.f32 %v741, %v745
      %v747 = vadd.f32 %v746, 1.0
      %v748 = vmul.f32 %v747, %v732
      %vm749 = vweird.f32 %v290
      %v750 = vadd.s32 %v733, 3
      %v751 = vand.u32 %v750, 3
      %vm752 = vcmp.lt.s32.totalorder %v751, 2
      %vm753 = vcmp.eq.s32.totalorder %v751, 0
      %v754 = vxor.u32 %v748, 2147483648
      %v755 = vsel %vm753, %v740, %v754
      %vm756 = vcmp.eq.s32.totalorder %v751, 2
      %v757 = vxor.u32 %v740, 2147483648
      %v758 = vsel %vm756, %v757, %v748
      %v759 = vsel %vm752, %v755, %v758
      %v760 = vsel %vm749, nan, %v759
      %v761 = vand.u32 2147483647, %v291
      %vm762 = vcmp.le.f32.partialorder %v761, 0.7853982
      %vm763 = vcmp.lt.s32.totalorder %v291, 0
      %v764 = vand.u32 %v291, 2139095040
      %v765 = vshrl.u32 %v764, 23
      %v766 = vsub.s32 %v765, 127
      %v767 = vand.u32 2147483647, %v291
      %v768 = vand.u32 %v767, 8388607
      %v769 = vor.u32 %v768, 8388608
      %v770 = vsub.s32 0, %v769
      %v771 = vadd.s32 %v766, 1
      %vm772 = vcmp.gt.s32.totalorder %v771, 0
      %v773 = vsel %vm772, %v771, 0
      %v774 = vshrl.u32 %v773, 5
      %v775 = vand.u32 %v773, 31
      %v776 = vsub.s32 32, %v775
      %v777 = vshrl.u32 683565275, %v776
      %v778 = vshll.u32 683565275, %v775
      %v779 = vshrl.u32 2475754826, %v776
      %v780 = vor.u32 %v778, %v779
      %v781 = vshll.u32 2475754826, %v775
      %v782 = vshrl.u32 2131351028, %v776
      %v783 = vor.u32 %v781, %v782
      %v784 = vshll.u32 2131351028, %v775
      %v785 = vshrl.u32 2102212464, %v776
      %v786 = vor.u32 %v784, %v785
      %v787 = vshll.u32 2102212464, %v775
      %v788 = vshrl.u32 920167782, %v776
      %v789 = vor.u32 %v787, %v788
      %v790 = vshll.u32 920167782, %v775
      %v791 = vshrl.u32 1326507024, %v776
      %v792 = vor.u32 %v790, %v791
      %vm793 = vcmp.lt.s32.totalorder %v774, 1
      %vm794 = vcmp.lt.s32.totalorder %v774, 2
      %vm795 = vcmp.lt.s32.totalorder %v774, 3
      %vm796 = vcmp.lt.s32.totalorder %v774, 4
      %v797 = vsel %vm793, %v777, %v780
      %v798 = vsel %vm796, %v786, 2102212464
      %v799 = vsel %vm795, %v783, %v798
      %v800 = vsel %vm794, %v797, %v799
      %v801 = vsel %vm793, %v780, %v783
      %v802 = vsel %vm796, %v789, 920167782
      %v803 = vsel %vm795, %v786, %v802
      %v804 = vsel %vm794, %v801, %v803
      %v805 = vsel %vm793, %v783, %v786
      %v806 = vsel %vm796, %v792, 1326507024
      %v807 = vsel %vm795, %v789, %v806
      %v808 = vsel %vm794, %v805, %v807
      %v809 = vshll.u32 %v769, 8
      %v810 = vand.u32 %v809, 65535
      %v811 = vshrl.u32 %v809, 16
      %v812 = vand.u32 %v808, 65535
      %v813 = vshrl.u32 %v808, 16
      %v814 = vmul.u32 %v810, %v812
      %v815 = vmul.u32 %v810, %v813
      %v816 = vmul.u32 %v811, %v812
      %v817 = vmul.u32 %v811, %v813
      %v818 = vshll.u32 %v815, 16
      %v819 = vshrl.u32 %v815, 16
      %v820 = vshll.u32 %v816, 16
      %v821 = vshrl.u32 %v816, 16
      %vm822 = vc.u32 %v814, %v818
      %v823 = vsel %vm822, 1, 0
      %v824 = vadd.s32 %v814, %v818
      %v825 = vadd.s32 %v817, %v823
      %vm826 = vc.u32 %v824, %v820
      %v827 = vsel %vm826, 1, 0
      %v828 = vadd.s32 %v824, %v820
      %v829 = vadd.s32 %v825, %v827
      %v830 = vadd.s32 %v829, %v819
      %v831 = vadd.s32 %v830, %v821
      %v832 = vand.u32 %v809, 65535
      %v833 = vshrl.u32 %v809, 16
      %v834 = vand.u32 %v804, 65535
      %v835 = vshrl.u32 %v804, 16
      %v836 = vmul.u32 %v832, %v834
      %v837 = vmul.u32 %v832, %v835
      %v838 = vmul.u32 %v833, %v834
      %v839 = vmul.u32 %v833, %v835
      %v840 = vshll.u32 %v837, 16
      %v841 = vshrl.u32 %v837, 16
      %v842 = vshll.u32 %v838, 16
      %v843 = vshrl.u32 %v838, 16
      %vm844 = vc.u32 %v836, %v840
      %v845 = vsel %vm844, 1, 0
      %v846 = vadd.s32 %v836, %v840
      %v847 = vadd.s32 %v839, %v845
      %vm848 = vc.u32 %v846, %v842
      %v849 = vsel %vm848, 1, 0
      %v850 = vadd.s32 %v846, %v842
      %v851 = vadd.s32 %v847, %v849
      %v852 = vadd.s32 %v851, %v841
      %v853 = vadd.s32 %v852, %v843
      %v854 = vmul.u32 %v809, %v800
      %v855 = vadd.s32 %v831, %v850
      %vm856 = vc.u32 %v831, %v850
      %v857 = vadd.s32 %v853, 1
      %v858 = vsel %vm856, %v857, %v853
      %v859 = vadd.s32 %v854, %v858
      %v860 = vadd.s32 %v859, 536870912
      %v861 = vshrl.u32 %v860, 30
      %v862 = vshll.u32 %v861, 30
      %v863 = vsub.s32 %v859, %v862
      %vm864 = vcmp.lt.s32.totalorder %v863, 0
      %v865 = vsub.s32 0, %v863
      %v866 = vsel %vm864, %v865, %v863
      %v867 = vclz %v866
      %v868 = vsub.s32 %v867, 2
      %vm869 = vcmp.gt.s32.totalorder 0, %v868
      %v870 = vsel %vm869, 0, %v868
      %v871 = vsub.s32 32, %v870
      %v872 = vshll.u32 %v863, %v870
      %v873 = vshrl.u32 %v855, %v871
      %v874 = vor.u32 %v872, %v873
      %v875 = vsub.s32 4294967266, %v870
      %v876 = vadd.s32 %v875, 127
      %v877 = vshll.u32 %v876, 23
      %v878 = vor.u32 4788187, %v877
      %v879 = vand.u32 2147483647, %v878
      %v881 = vcvt.s32.f32 %v874
      %v882 = vmul.f32 %v881, %v879
      %v883 = vxor.u32 %v882, 2147483648
      %v884 = vsel %vm763, %v883, %v882
      %v885 = vsub.s32 4, %v861
      %v886 = vsel %vm763, %v885, %v861
      %v887 = vsel %vm762, %v291, %v884
      %v888 = vsel %vm762, 0, %v886
      %v889 = vmul.f32 %v887, %v887
      %v890 = vmul.f32 %v889, -0.001358992
      %v891 = vadd.f32 %v890, 0.041655596
      %v892 = vmul.f32 %v889, %v891
      %v893 = vadd.f32 %v892, -0.4999988
      %v894 = vmul.f32 %v889, %v893
      %v895 = vadd.f32 1.0, %v894
      %v896 = vmul.f32 %v887, %v887
      %v897 = vmul.f32 %v896, -0.00019511016
      %v898 = vadd.f32 %v897, 0.008332121
      %v899 = vmul.f32 %v896, %v898
      %v900 = vadd.f32 %v899, -0.16666654
      %v901 = vmul.f32 %v896, %v900
      %v902 = vadd.f32 %v901, 1.0
      %v903 = vmul.f32 %v902, %v887
      %vm904 = vweird.f32 %v291
      %v905 = vadd.s32 %v888, 3
      %v906 = vand.u32 %v905, 3
      %vm907 = vcmp.lt.s32.totalorder %v906, 2
      %vm908 = vcmp.eq.s32.totalorder %v906, 0
      %v909 = vxor.u32 %v903, 2147483648
      %v910 = vsel %vm908, %v895, %v909
      %vm911 = vcmp.eq.s32.totalorder %v906, 2
      %v912 = vxor.u32 %v895, 2147483648
      %v913 = vsel %vm911, %v912, %v903
      %v914 = vsel %vm907, %v910, %v913
      %v915 = vsel %vm904, nan, %v914
      %v916 = vand.u32 2147483647, %v292
      %vm917 = vcmp.le.f32.partialorder %v916, 0.7853982
      %vm918 = vcmp.lt.s32.totalorder %v292, 0
      %v919 = vand.u32 %v292, 2139095040
      %v920 = vshrl.u32 %v919, 23
      %v921 = vsub.s32 %v920, 127
      %v922 = vand.u32 2147483647, %v292
      %v923 = vand.u32 %v922, 8388607
      %v924 = vor.u32 %v923, 8388608
      %v925 = vsub.s32 0, %v924
      %v926 = vadd.s32 %v921, 1
      %vm927 = vcmp.gt.s32.totalorder %v926, 0
      %v928 = vsel %vm927, %v926, 0
      %v929 = vshrl.u32 %v928, 5
      %v930 = vand.u32 %v928, 31
      %v931 = vsub.s32 32, %v930
      %v932 = vshrl.u32 683565275, %v931
      %v933 = vshll.u32 683565275, %v930
      %v934 = vshrl.u32 2475754826, %v931
      %v935 = vor.u32 %v933, %v934
      %v936 = vshll.u32 2475754826, %v930
      %v937 = vshrl.u32 2131351028, %v931
      %v938 = vor.u32 %v936, %v937
      %v939 = vshll.u32 2131351028, %v930
      %v940 = vshrl.u32 2102212464, %v931
      %v941 = vor.u32 %v939, %v940
      %v942 = vshll.u32 2102212464, %v930
      %v943 = vshrl.u32 920167782, %v931
      %v944 = vor.u32 %v942, %v943
      %v945 = vshll.u32 920167782, %v930
      %v946 = vshrl.u32 1326507024, %v931
      %v947 = vor.u32 %v945, %v946
      %vm948 = vcmp.lt.s32.totalorder %v929, 1
      %vm949 = vcmp.lt.s32.totalorder %v929, 2
      %vm950 = vcmp.lt.s32.totalorder %v929, 3
      %vm951 = vcmp.lt.s32.totalorder %v929, 4
      %v952 = vsel %vm948, %v932, %v935
      %v953 = vsel %vm951, %v941, 2102212464
      %v954 = vsel %vm950, %v938, %v953
      %v955 = vsel %vm949, %v952, %v954
      %v956 = vsel %vm948, %v935, %v938
      %v957 = vsel %vm951, %v944, 920167782
      %v958 = vsel %vm950, %v941, %v957
      %v959 = vsel %vm949, %v956, %v958
      %v960 = vsel %vm948, %v938, %v941
      %v961 = vsel %vm951, %v947, 1326507024
      %v962 = vsel %vm950, %v944, %v961
      %v963 = vsel %vm949, %v960, %v962
      %v964 = vshll.u32 %v924, 8
      %v965 = vand.u32 %v964, 65535
      %v966 = vshrl.u32 %v964, 16
      %v967 = vand.u32 %v963, 65535
      %v968 = vshrl.u32 %v963, 16
      %v969 = vmul.u32 %v965, %v967
      %v970 = vmul.u32 %v965, %v968
      %v971 = vmul.u32 %v966, %v967
      %v972 = vmul.u32 %v966, %v968
      %v973 = vshll.u32 %v970, 16
      %v974 = vshrl.u32 %v970, 16
      %v975 = vshll.u32 %v971, 16
      %v976 = vshrl.u32 %v971, 16
      %vm977 = vc.u32 %v969, %v973
      %v978 = vsel %vm977, 1, 0
      %v979 = vadd.s32 %v969, %v973
      %v980 = vadd.s32 %v972, %v978
      %vm981 = vc.u32 %v979, %v975
      %v982 = vsel %vm981, 1, 0
      %v983 = vadd.s32 %v979, %v975
      %v984 = vadd.s32 %v980, %v982
      %v985 = vadd.s32 %v984, %v974
      %v986 = vadd.s32 %v985, %v976
      %v987 = vand.u32 %v964, 65535
      %v988 = vshrl.u32 %v964, 16
      %v989 = vand.u32 %v959, 65535
      %v990 = vshrl.u32 %v959, 16
      %v991 = vmul.u32 %v987, %v989
      %v992 = vmul.u32 %v987, %v990
      %v993 = vmul.u32 %v988, %v989
      %v994 = vmul.u32 %v988, %v990
      %v995 = vshll.u32 %v992, 16
      %v996 = vshrl.u32 %v992, 16
      %v997 = vshll.u32 %v993, 16
      %v998 = vshrl.u32 %v993, 16
      %vm999 = vc.u32 %v991, %v995
      %v1000 = vsel %vm999, 1, 0
      %v1001 = vadd.s32 %v991, %v995
      %v1002 = vadd.s32 %v994, %v1000
      %vm1003 = vc.u32 %v1001, %v997
      %v1004 = vsel %vm1003, 1, 0
      %v1005 = vadd.s32 %v1001, %v997
      %v1006 = vadd.s32 %v1002, %v1004
      %v1007 = vadd.s32 %v1006, %v996
      %v1008 = vadd.s32 %v1007, %v998
      %v1009 = vmul.u32 %v964, %v955
      %v1010 = vadd.s32 %v986, %v1005
      %vm1011 = vc.u32 %v986, %v1005
      %v1012 = vadd.s32 %v1008, 1
      %v1013 = vsel %vm1011, %v1012, %v1008
      %v1014 = vadd.s32 %v1009, %v1013
      %v1015 = vadd.s32 %v1014, 536870912
      %v1016 = vshrl.u32 %v1015, 30
      %v1017 = vshll.u32 %v1016, 30
      %v1018 = vsub.s32 %v1014, %v1017
      %vm1019 = vcmp.lt.s32.totalorder %v1018, 0
      %v1020 = vsub.s32 0, %v1018
      %v1021 = vsel %vm1019, %v1020, %v1018
      %v1022 = vclz %v1021
      %v1023 = vsub.s32 %v1022, 2
      %vm1024 = vcmp.gt.s32.totalorder 0, %v1023
      %v1025 = vsel %vm1024, 0, %v1023
      %v1026 = vsub.s32 32, %v1025
      %v1027 = vshll.u32 %v1018, %v1025
      %v1028 = vshrl.u32 %v1010, %v1026
      %v1029 = vor.u32 %v1027, %v1028
      %v1030 = vsub.s32 4294967266, %v1025
      %v1031 = vadd.s32 %v1030, 127
      %v1032 = vshll.u32 %v1031, 23
      %v1033 = vor.u32 4788187, %v1032
      %v1034 = vand.u32 2147483647, %v1033
      %v1036 = vcvt.s32.f32 %v1029
      %v1037 = vmul.f32 %v1036, %v1034
      %v1038 = vxor.u32 %v1037, 2147483648
      %v1039 = vsel %vm918, %v1038, %v1037
      %v1040 = vsub.s32 4, %v1016
      %v1041 = vsel %vm918, %v1040, %v1016
      %v1042 = vsel %vm917, %v292, %v1039
      %v1043 = vsel %vm917, 0, %v1041
      %v1044 = vmul.f32 %v1042, %v1042
      %v1045 = vmul.f32 %v1044, -0.001358992
      %v1046 = vadd.f32 %v1045, 0.041655596
      %v1047 = vmul.f32 %v1044, %v1046
      %v1048 = vadd.f32 %v1047, -0.4999988
      %v1049 = vmul.f32 %v1044, %v1048
      %v1050 = vadd.f32 1.0, %v1049
      %v1051 = vmul.f32 %v1042, %v1042
      %v1052 = vmul.f32 %v1051, -0.00019511016
      %v1053 = vadd.f32 %v1052, 0.008332121
      %v1054 = vmul.f32 %v1051, %v1053
      %v1055 = vadd.f32 %v1054, -0.16666654
      %v1056 = vmul.f32 %v1051, %v1055
      %v1057 = vadd.f32 %v1056, 1.0
      %v1058 = vmul.f32 %v1057, %v1042
      %vm1059 = vweird.f32 %v292
      %v1060 = vadd.s32 %v1043, 3
      %v1061 = vand.u32 %v1060, 3
      %vm1062 = vcmp.lt.s32.totalorder %v1061, 2
      %vm1063 = vcmp.eq.s32.totalorder %v1061, 0
      %v1064 = vxor.u32 %v1058, 2147483648
      %v1065 = vsel %vm1063, %v1050, %v1064
      %vm1066 = vcmp.eq.s32.totalorder %v1061, 2
      %v1067 = vxor.u32 %v1050, 2147483648
      %v1068 = vsel %vm1066, %v1067, %v1058
      %v1069 = vsel %vm1062, %v1065, %v1068
      %v1070 = vsel %vm1059, nan, %v1069
      %v1071 = vand.u32 2147483647, %v293
      %vm1072 = vcmp.le.f32.partialorder %v1071, 0.7853982
      %vm1073 = vcmp.lt.s32.totalorder %v293, 0
      %v1074 = vand.u32 %v293, 2139095040
      %v1075 = vshrl.u32 %v1074, 23
      %v1076 = vsub.s32 %v1075, 127
      %v1077 = vand.u32 2147483647, %v293
      %v1078 = vand.u32 %v1077, 8388607
      %v1079 = vor.u32 %v1078, 8388608
      %v1080 = vsub.s32 0, %v1079
      %v1081 = vadd.s32 %v1076, 1
      %vm1082 = vcmp.gt.s32.totalorder %v1081, 0
      %v1083 = vsel %vm1082, %v1081, 0
      %v1084 = vshrl.u32 %v1083, 5
      %v1085 = vand.u32 %v1083, 31
      %v1086 = vsub.s32 32, %v1085
      %v1087 = vshrl.u32 683565275, %v1086
      %v1088 = vshll.u32 683565275, %v1085
      %v1089 = vshrl.u32 2475754826, %v1086
      %v1090 = vor.u32 %v1088, %v1089
      %v1091 = vshll.u32 2475754826, %v1085
      %v1092 = vshrl.u32 2131351028, %v1086
      %v1093 = vor.u32 %v1091, %v1092
      %v1094 = vshll.u32 2131351028, %v1085
      %v1095 = vshrl.u32 2102212464, %v1086
      %v1096 = vor.u32 %v1094, %v1095
      %v1097 = vshll.u32 2102212464, %v1085
      %v1098 = vshrl.u32 920167782, %v1086
      %v1099 = vor.u32 %v1097, %v1098
      %v1100 = vshll.u32 920167782, %v1085
      %v1101 = vshrl.u32 1326507024, %v1086
      %v1102 = vor.u32 %v1100, %v1101
      %vm1103 = vcmp.lt.s32.totalorder %v1084, 1
      %vm1104 = vcmp.lt.s32.totalorder %v1084, 2
      %vm1105 = vcmp.lt.s32.totalorder %v1084, 3
      %vm1106 = vcmp.lt.s32.totalorder %v1084, 4
      %v1107 = vsel %vm1103, %v1087, %v1090
      %v1108 = vsel %vm1106, %v1096, 2102212464
      %v1109 = vsel %vm1105, %v1093, %v1108
      %v1110 = vsel %vm1104, %v1107, %v1109
      %v1111 = vsel %vm1103, %v1090, %v1093
      %v1112 = vsel %vm1106, %v1099, 920167782
      %v1113 = vsel %vm1105, %v1096, %v1112
      %v1114 = vsel %vm1104, %v1111, %v1113
      %v1115 = vsel %vm1103, %v1093, %v1096
      %v1116 = vsel %vm1106, %v1102, 1326507024
      %v1117 = vsel %vm1105, %v1099, %v1116
      %v1118 = vsel %vm1104, %v1115, %v1117
      %v1119 = vshll.u32 %v1079, 8
      %v1120 = vand.u32 %v1119, 65535
      %v1121 = vshrl.u32 %v1119, 16
      %v1122 = vand.u32 %v1118, 65535
      %v1123 = vshrl.u32 %v1118, 16
      %v1124 = vmul.u32 %v1120, %v1122
      %v1125 = vmul.u32 %v1120, %v1123
      %v1126 = vmul.u32 %v1121, %v1122
      %v1127 = vmul.u32 %v1121, %v1123
      %v1128 = vshll.u32 %v1125, 16
      %v1129 = vshrl.u32 %v1125, 16
      %v1130 = vshll.u32 %v1126, 16
      %v1131 = vshrl.u32 %v1126, 16
      %vm1132 = vc.u32 %v1124, %v1128
      %v1133 = vsel %vm1132, 1, 0
      %v1134 = vadd.s32 %v1124, %v1128
      %v1135 = vadd.s32 %v1127, %v1133
      %vm1136 = vc.u32 %v1134, %v1130
      %v1137 = vsel %vm1136, 1, 0
      %v1138 = vadd.s32 %v1134, %v1130
      %v1139 = vadd.s32 %v1135, %v1137
      %v1140 = vadd.s32 %v1139, %v1129
      %v1141 = vadd.s32 %v1140, %v1131
      %v1142 = vand.u32 %v1119, 65535
      %v1143 = vshrl.u32 %v1119, 16
      %v1144 = vand.u32 %v1114, 65535
      %v1145 = vshrl.u32 %v1114, 16
      %v1146 = vmul.u32 %v1142, %v1144
      %v1147 = vmul.u32 %v1142, %v1145
      %v1148 = vmul.u32 %v1143, %v1144
      %v1149 = vmul.u32 %v1143, %v1145
      %v1150 = vshll.u32 %v1147, 16
      %v1151 = vshrl.u32 %v1147, 16
      %v1152 = vshll.u32 %v1148, 16
      %v1153 = vshrl.u32 %v1148, 16
      %vm1154 = vc.u32 %v1146, %v1150
      %v1155 = vsel %vm1154, 1, 0
      %v1156 = vadd.s32 %v1146, %v1150
      %v1157 = vadd.s32 %v1149, %v1155
      %vm1158 = vc.u32 %v1156, %v1152
      %v1159 = vsel %vm1158, 1, 0
      %v1160 = vadd.s32 %v1156, %v1152
      %v1161 = vadd.s32 %v1157, %v1159
      %v1162 = vadd.s32 %v1161, %v1151
      %v1163 = vadd.s32 %v1162, %v1153
      %v1164 = vmul.u32 %v1119, %v1110
      %v1165 = vadd.s32 %v1141, %v1160
      %vm1166 = vc.u32 %v1141, %v1160
      %v1167 = vadd.s32 %v1163, 1
      %v1168 = vsel %vm1166, %v1167, %v1163
      %v1169 = vadd.s32 %v1164, %v1168
      %v1170 = vadd.s32 %v1169, 536870912
      %v1171 = vshrl.u32 %v1170, 30
      %v1172 = vshll.u32 %v1171, 30
      %v1173 = vsub.s32 %v1169, %v1172
      %vm1174 = vcmp.lt.s32.totalorder %v1173, 0
      %v1175 = vsub.s32 0, %v1173
      %v1176 = vsel %vm1174, %v1175, %v1173
      %v1177 = vclz %v1176
      %v1178 = vsub.s32 %v1177, 2
      %vm1179 = vcmp.gt.s32.totalorder 0, %v1178
      %v1180 = vsel %vm1179, 0, %v1178
      %v1181 = vsub.s32 32, %v1180
      %v1182 = vshll.u32 %v1173, %v1180
      %v1183 = vshrl.u32 %v1165, %v1181
      %v1184 = vor.u32 %v1182, %v1183
      %v1185 = vsub.s32 4294967266, %v1180
      %v1186 = vadd.s32 %v1185, 127
      %v1187 = vshll.u32 %v1186, 23
      %v1188 = vor.u32 4788187, %v1187
      %v1189 = vand.u32 2147483647, %v1188
      %v1191 = vcvt.s32.f32 %v1184
      %v1192 = vmul.f32 %v1191, %v1189
      %v1193 = vxor.u32 %v1192, 2147483648
      %v1194 = vsel %vm1073, %v1193, %v1192
      %v1195 = vsub.s32 4, %v1171
      %v1196 = vsel %vm1073, %v1195, %v1171
      %v1197 = vsel %vm1072, %v293, %v1194
      %v1198 = vsel %vm1072, 0, %v1196
      %v1199 = vmul.f32 %v1197, %v1197
      %v1200 = vmul.f32 %v1199, -0.001358992
      %v1201 = vadd.f32 %v1200, 0.041655596
      %v1202 = vmul.f32 %v1199, %v1201
      %v1203 = vadd.f32 %v1202, -0.4999988
      %v1204 = vmul.f32 %v1199, %v1203
      %v1205 = vadd.f32 1.0, %v1204
      %v1206 = vmul.f32 %v1197, %v1197
      %v1207 = vmul.f32 %v1206, -0.00019511016
      %v1208 = vadd.f32 %v1207, 0.008332121
      %v1209 = vmul.f32 %v1206, %v1208
      %v1210 = vadd.f32 %v1209, -0.16666654
      %v1211 = vmul.f32 %v1206, %v1210
      %v1212 = vadd.f32 %v1211, 1.0
      %v1213 = vmul.f32 %v1212, %v1197
      %vm1214 = vweird.f32 %v293
      %v1215 = vadd.s32 %v1198, 3
      %v1216 = vand.u32 %v1215, 3
      %vm1217 = vcmp.lt.s32.totalorder %v1216, 2
      %vm1218 = vcmp.eq.s32.totalorder %v1216, 0
      %v1219 = vxor.u32 %v1213, 2147483648
      %v1220 = vsel %vm1218, %v1205, %v1219
      %vm1221 = vcmp.eq.s32.totalorder %v1216, 2
      %v1222 = vxor.u32 %v1205, 2147483648
      %v1223 = vsel %vm1221, %v1222, %v1213
      %v1224 = vsel %vm1217, %v1220, %v1223
      %v1225 = vsel %vm1214, nan, %v1224
      %v1226 = vand.u32 2147483647, %v294
      %vm1227 = vcmp.le.f32.partialorder %v1226, 0.7853982
      %vm1228 = vcmp.lt.s32.totalorder %v294, 0
      %v1229 = vand.u32 %v294, 2139095040
      %v1230 = vshrl.u32 %v1229, 23
      %v1231 = vsub.s32 %v1230, 127
      %v1232 = vand.u32 2147483647, %v294
      %v1233 = vand.u32 %v1232, 8388607
      %v1234 = vor.u32 %v1233, 8388608
      %v1235 = vsub.s32 0, %v1234
      %v1236 = vadd.s32 %v1231, 1
      %vm1237 = vcmp.gt.s32.totalorder %v1236, 0
      %v1238 = vsel %vm1237, %v1236, 0
      %v1239 = vshrl.u32 %v1238, 5
      %v1240 = vand.u32 %v1238, 31
      %v1241 = vsub.s32 32, %v1240
      %v1242 = vshrl.u32 683565275, %v1241
      %v1243 = vshll.u32 683565275, %v1240
      %v1244 = vshrl.u32 2475754826, %v1241
      %v1245 = vor.u32 %v1243, %v1244
      %v1246 = vshll.u32 2475754826, %v1240
      %v1247 = vshrl.u32 2131351028, %v1241
      %v1248 = vor.u32 %v1246, %v1247
      %v1249 = vshll.u32 2131351028, %v1240
      %v1250 = vshrl.u32 2102212464, %v1241
      %v1251 = vor.u32 %v1249, %v1250
      %v1252 = vshll.u32 2102212464, %v1240
      %v1253 = vshrl.u32 920167782, %v1241
      %v1254 = vor.u32 %v1252, %v1253
      %v1255 = vshll.u32 920167782, %v1240
      %v1256 = vshrl.u32 1326507024, %v1241
      %v1257 = vor.u32 %v1255, %v1256
      %vm1258 = vcmp.lt.s32.totalorder %v1239, 1
      %vm1259 = vcmp.lt.s32.totalorder %v1239, 2
      %vm1260 = vcmp.lt.s32.totalorder %v1239, 3
      %vm1261 = vcmp.lt.s32.totalorder %v1239, 4
      %v1262 = vsel %vm1258, %v1242, %v1245
      %v1263 = vsel %vm1261, %v1251, 2102212464
      %v1264 = vsel %vm1260, %v1248, %v1263
      %v1265 = vsel %vm1259, %v1262, %v1264
      %v1266 = vsel %vm1258, %v1245, %v1248
      %v1267 = vsel %vm1261, %v1254, 920167782
      %v1268 = vsel %vm1260, %v1251, %v1267
      %v1269 = vsel %vm1259, %v1266, %v1268
      %v1270 = vsel %vm1258, %v1248, %v1251
      %v1271 = vsel %vm1261, %v1257, 1326507024
      %v1272 = vsel %vm1260, %v1254, %v1271
      %v1273 = vsel %vm1259, %v1270, %v1272
      %v1274 = vshll.u32 %v1234, 8
      %v1275 = vand.u32 %v1274, 65535
      %v1276 = vshrl.u32 %v1274, 16
      %v1277 = vand.u32 %v1273, 65535
      %v1278 = vshrl.u32 %v1273, 16
      %v1279 = vmul.u32 %v1275, %v1277
      %v1280 = vmul.u32 %v1275, %v1278
      %v1281 = vmul.u32 %v1276, %v1277
      %v1282 = vmul.u32 %v1276, %v1278
      %v1283 = vshll.u32 %v1280, 16
      %v1284 = vshrl.u32 %v1280, 16
      %v1285 = vshll.u32 %v1281, 16
      %v1286 = vshrl.u32 %v1281, 16
      %vm1287 = vc.u32 %v1279, %v1283
      %v1288 = vsel %vm1287, 1, 0
      %v1289 = vadd.s32 %v1279, %v1283
      %v1290 = vadd.s32 %v1282, %v1288
      %vm1291 = vc.u32 %v1289, %v1285
      %v1292 = vsel %vm1291, 1, 0
      %v1293 = vadd.s32 %v1289, %v1285
      %v1294 = vadd.s32 %v1290, %v1292
      %v1295 = vadd.s32 %v1294, %v1284
      %v1296 = vadd.s32 %v1295, %v1286
      %v1297 = vand.u32 %v1274, 65535
      %v1298 = vshrl.u32 %v1274, 16
      %v1299 = vand.u32 %v1269, 65535
      %v1300 = vshrl.u32 %v1269, 16
      %v1301 = vmul.u32 %v1297, %v1299
      %v1302 = vmul.u32 %v1297, %v1300
      %v1303 = vmul.u32 %v1298, %v1299
      %v1304 = vmul.u32 %v1298, %v1300
      %v1305 = vshll.u32 %v1302, 16
      %v1306 = vshrl.u32 %v1302, 16
      %v1307 = vshll.u32 %v1303, 16
      %v1308 = vshrl.u32 %v1303, 16
      %vm1309 = vc.u32 %v1301, %v1305
      %v1310 = vsel %vm1309, 1, 0
      %v1311 = vadd.s32 %v1301, %v1305
      %v1312 = vadd.s32 %v1304, %v1310
      %vm1313 = vc.u32 %v1311, %v1307
      %v1314 = vsel %vm1313, 1, 0
      %v1315 = vadd.s32 %v1311, %v1307
      %v1316 = vadd.s32 %v1312, %v1314
      %v1317 = vadd.s32 %v1316, %v1306
      %v1318 = vadd.s32 %v1317, %v1308
      %v1319 = vmul.u32 %v1274, %v1265
      %v1320 = vadd.s32 %v1296, %v1315
      %vm1321 = vc.u32 %v1296, %v1315
      %v1322 = vadd.s32 %v1318, 1
      %v1323 = vsel %vm1321, %v1322, %v1318
      %v1324 = vadd.s32 %v1319, %v1323
      %v1325 = vadd.s32 %v1324, 536870912
      %v1326 = vshrl.u32 %v1325, 30
      %v1327 = vshll.u32 %v1326, 30
      %v1328 = vsub.s32 %v1324, %v1327
      %vm1329 = vcmp.lt.s32.totalorder %v1328, 0
      %v1330 = vsub.s32 0, %v1328
      %v1331 = vsel %vm1329, %v1330, %v1328
      %v1332 = vclz %v1331
      %v1333 = vsub.s32 %v1332, 2
      %vm1334 = vcmp.gt.s32.totalorder 0, %v1333
      %v1335 = vsel %vm1334, 0, %v1333
      %v1336 = vsub.s32 32, %v1335
      %v1337 = vshll.u32 %v1328, %v1335
      %v1338 = vshrl.u32 %v1320, %v1336
      %v1339 = vor.u32 %v1337, %v1338
      %v1340 = vsub.s32 4294967266, %v1335
      %v1341 = vadd.s32 %v1340, 127
      %v1342 = vshll.u32 %v1341, 23
      %v1343 = vor.u32 4788187, %v1342
      %v1344 = vand.u32 2147483647, %v1343
      %v1346 = vcvt.s32.f32 %v1339
      %v1347 = vmul.f32 %v1346, %v1344
      %v1348 = vxor.u32 %v1347, 2147483648
      %v1349 = vsel %vm1228, %v1348, %v1347
      %v1350 = vsub.s32 4, %v1326
      %v1351 = vsel %vm1228, %v1350, %v1326
      %v1352 = vsel %vm1227, %v294, %v1349
      %v1353 = vsel %vm1227, 0, %v1351
      %v1354 = vmul.f32 %v1352, %v1352
      %v1355 = vmul.f32 %v1354, -0.001358992
      %v1356 = vadd.f32 %v1355, 0.041655596
      %v1357 = vmul.f32 %v1354, %v1356
      %v1358 = vadd.f32 %v1357, -0.4999988
      %v1359 = vmul.f32 %v1354, %v1358
      %v1360 = vadd.f32 1.0, %v1359
      %v1361 = vmul.f32 %v1352, %v1352
      %v1362 = vmul.f32 %v1361, -0.00019511016
      %v1363 = vadd.f32 %v1362, 0.008332121
      %v1364 = vmul.f32 %v1361, %v1363
      %v1365 = vadd.f32 %v1364, -0.16666654
      %v1366 = vmul.f32 %v1361, %v1365
      %v1367 = vadd.f32 %v1366, 1.0
      %v1368 = vmul.f32 %v1367, %v1352
      %vm1369 = vweird.f32 %v294
      %v1370 = vadd.s32 %v1353, 3
      %v1371 = vand.u32 %v1370, 3
      %vm1372 = vcmp.lt.s32.totalorder %v1371, 2
      %vm1373 = vcmp.eq.s32.totalorder %v1371, 0
      %v1374 = vxor.u32 %v1368, 2147483648
      %v1375 = vsel %vm1373, %v1360, %v1374
      %vm1376 = vcmp.eq.s32.totalorder %v1371, 2
      %v1377 = vxor.u32 %v1360, 2147483648
      %v1378 = vsel %vm1376, %v1377, %v1368
      %v1379 = vsel %vm1372, %v1375, %v1378
      %v1380 = vsel %vm1369, nan, %v1379
      %v1381 = vand.u32 2147483647, %v295
      %vm1382 = vcmp.le.f32.partialorder %v1381, 0.7853982
      %vm1383 = vcmp.lt.s32.totalorder %v295, 0
      %v1384 = vand.u32 %v295, 2139095040
      %v1385 = vshrl.u32 %v1384, 23
      %v1386 = vsub.s32 %v1385, 127
      %v1387 = vand.u32 2147483647, %v295
      %v1388 = vand.u32 %v1387, 8388607
      %v1389 = vor.u32 %v1388, 8388608
      %v1390 = vsub.s32 0, %v1389
      %v1391 = vadd.s32 %v1386, 1
      %vm1392 = vcmp.gt.s32.totalorder %v1391, 0
      %v1393 = vsel %vm1392, %v1391, 0
      %v1394 = vshrl.u32 %v1393, 5
      %v1395 = vand.u32 %v1393, 31
      %v1396 = vsub.s32 32, %v1395
      %v1397 = vshrl.u32 683565275, %v1396
      %v1398 = vshll.u32 683565275, %v1395
      %v1399 = vshrl.u32 2475754826, %v1396
      %v1400 = vor.u32 %v1398, %v1399
      %v1401 = vshll.u32 2475754826, %v1395
      %v1402 = vshrl.u32 2131351028, %v1396
      %v1403 = vor.u32 %v1401, %v1402
      %v1404 = vshll.u32 2131351028, %v1395
      %v1405 = vshrl.u32 2102212464, %v1396
      %v1406 = vor.u32 %v1404, %v1405
      %v1407 = vshll.u32 2102212464, %v1395
      %v1408 = vshrl.u32 920167782, %v1396
      %v1409 = vor.u32 %v1407, %v1408
      %v1410 = vshll.u32 920167782, %v1395
      %v1411 = vshrl.u32 1326507024, %v1396
      %v1412 = vor.u32 %v1410, %v1411
      %vm1413 = vcmp.lt.s32.totalorder %v1394, 1
      %vm1414 = vcmp.lt.s32.totalorder %v1394, 2
      %vm1415 = vcmp.lt.s32.totalorder %v1394, 3
      %vm1416 = vcmp.lt.s32.totalorder %v1394, 4
      %v1417 = vsel %vm1413, %v1397, %v1400
      %v1418 = vsel %vm1416, %v1406, 2102212464
      %v1419 = vsel %vm1415, %v1403, %v1418
      %v1420 = vsel %vm1414, %v1417, %v1419
      %v1421 = vsel %vm1413, %v1400, %v1403
      %v1422 = vsel %vm1416, %v1409, 920167782
      %v1423 = vsel %vm1415, %v1406, %v1422
      %v1424 = vsel %vm1414, %v1421, %v1423
      %v1425 = vsel %vm1413, %v1403, %v1406
      %v1426 = vsel %vm1416, %v1412, 1326507024
      %v1427 = vsel %vm1415, %v1409, %v1426
      %v1428 = vsel %vm1414, %v1425, %v1427
      %v1429 = vshll.u32 %v1389, 8
      %v1430 = vand.u32 %v1429, 65535
      %v1431 = vshrl.u32 %v1429, 16
      %v1432 = vand.u32 %v1428, 65535
      %v1433 = vshrl.u32 %v1428, 16
      %v1434 = vmul.u32 %v1430, %v1432
      %v1435 = vmul.u32 %v1430, %v1433
      %v1436 = vmul.u32 %v1431, %v1432
      %v1437 = vmul.u32 %v1431, %v1433
      %v1438 = vshll.u32 %v1435, 16
      %v1439 = vshrl.u32 %v1435, 16
      %v1440 = vshll.u32 %v1436, 16
      %v1441 = vshrl.u32 %v1436, 16
      %vm1442 = vc.u32 %v1434, %v1438
      %v1443 = vsel %vm1442, 1, 0
      %v1444 = vadd.s32 %v1434, %v1438
      %v1445 = vadd.s32 %v1437, %v1443
      %vm1446 = vc.u32 %v1444, %v1440
      %v1447 = vsel %vm1446, 1, 0
      %v1448 = vadd.s32 %v1444, %v1440
      %v1449 = vadd.s32 %v1445, %v1447
      %v1450 = vadd.s32 %v1449, %v1439
      %v1451 = vadd.s32 %v1450, %v1441
      %v1452 = vand.u32 %v1429, 65535
      %v1453 = vshrl.u32 %v1429, 16
      %v1454 = vand.u32 %v1424, 65535
      %v1455 = vshrl.u32 %v1424, 16
      %v1456 = vmul.u32 %v1452, %v1454
      %v1457 = vmul.u32 %v1452, %v1455
      %v1458 = vmul.u32 %v1453, %v1454
      %v1459 = vmul.u32 %v1453, %v1455
      %v1460 = vshll.u32 %v1457, 16
      %v1461 = vshrl.u32 %v1457, 16
      %v1462 = vshll.u32 %v1458, 16
      %v1463 = vshrl.u32 %v1458, 16
      %vm1464 = vc.u32 %v1456, %v1460
      %v1465 = vsel %vm1464, 1, 0
      %v1466 = vadd.s32 %v1456, %v1460
      %v1467 = vadd.s32 %v1459, %v1465
      %vm1468 = vc.u32 %v1466, %v1462
      %v1469 = vsel %vm1468, 1, 0
      %v1470 = vadd.s32 %v1466, %v1462
      %v1471 = vadd.s32 %v1467, %v1469
      %v1472 = vadd.s32 %v1471, %v1461
      %v1473 = vadd.s32 %v1472, %v1463
      %v1474 = vmul.u32 %v1429, %v1420
      %v1475 = vadd.s32 %v1451, %v1470
      %vm1476 = vc.u32 %v1451, %v1470
      %v1477 = vadd.s32 %v1473, 1
      %v1478 = vsel %vm1476, %v1477, %v1473
      %v1479 = vadd.s32 %v1474, %v1478
      %v1480 = vadd.s32 %v1479, 536870912
      %v1481 = vshrl.u32 %v1480, 30
      %v1482 = vshll.u32 %v1481, 30
      %v1483 = vsub.s32 %v1479, %v1482
      %vm1484 = vcmp.lt.s32.totalorder %v1483, 0
      %v1485 = vsub.s32 0, %v1483
      %v1486 = vsel %vm1484, %v1485, %v1483
      %v1487 = vclz %v1486
      %v1488 = vsub.s32 %v1487, 2
      %vm1489 = vcmp.gt.s32.totalorder 0, %v1488
      %v1490 = vsel %vm1489, 0, %v1488
      %v1491 = vsub.s32 32, %v1490
      %v1492 = vshll.u32 %v1483, %v1490
      %v1493 = vshrl.u32 %v1475, %v1491
      %v1494 = vor.u32 %v1492, %v1493
      %v1495 = vsub.s32 4294967266, %v1490
      %v1496 = vadd.s32 %v1495, 127
      %v1497 = vshll.u32 %v1496, 23
      %v1498 = vor.u32 4788187, %v1497
      %v1499 = vand.u32 2147483647, %v1498
      %v1501 = vcvt.s32.f32 %v1494
      %v1502 = vmul.f32 %v1501, %v1499
      %v1503 = vxor.u32 %v1502, 2147483648
      %v1504 = vsel %vm1383, %v1503, %v1502
      %v1505 = vsub.s32 4, %v1481
      %v1506 = vsel %vm1383, %v1505, %v1481
      %v1507 = vsel %vm1382, %v295, %v1504
      %v1508 = vsel %vm1382, 0, %v1506
      %v1509 = vmul.f32 %v1507, %v1507
      %v1510 = vmul.f32 %v1509, -0.001358992
      %v1511 = vadd.f32 %v1510, 0.041655596
      %v1512 = vmul.f32 %v1509, %v1511
      %v1513 = vadd.f32 %v1512, -0.4999988
      %v1514 = vmul.f32 %v1509, %v1513
      %v1515 = vadd.f32 1.0, %v1514
      %v1516 = vmul.f32 %v1507, %v1507
      %v1517 = vmul.f32 %v1516, -0.00019511016
      %v1518 = vadd.f32 %v1517, 0.008332121
      %v1519 = vmul.f32 %v1516, %v1518
      %v1520 = vadd.f32 %v1519, -0.16666654
      %v1521 = vmul.f32 %v1516, %v1520
      %v1522 = vadd.f32 %v1521, 1.0
      %v1523 = vmul.f32 %v1522, %v1507
      %vm1524 = vweird.f32 %v295
      %v1525 = vadd.s32 %v1508, 3
      %v1526 = vand.u32 %v1525, 3
      %vm1527 = vcmp.lt.s32.totalorder %v1526, 2
      %vm1528 = vcmp.eq.s32.totalorder %v1526, 0
      %v1529 = vxor.u32 %v1523, 2147483648
      %v1530 = vsel %vm1528, %v1515, %v1529
      %vm1531 = vcmp.eq.s32.totalorder %v1526, 2
      %v1532 = vxor.u32 %v1515, 2147483648
      %v1533 = vsel %vm1531, %v1532, %v1523
      %v1534 = vsel %vm1527, %v1530, %v1533
      %v1535 = vsel %vm1524, nan, %v1534
      %v1536 = vand.u32 2147483647, %v288
      %vm1537 = vcmp.le.f32.partialorder %v1536, 0.7853982
      %vm1538 = vcmp.lt.s32.totalorder %v288, 0
      %v1539 = vand.u32 %v288, 2139095040
      %v1540 = vshrl.u32 %v1539, 23
      %v1541 = vsub.s32 %v1540, 127
      %v1542 = vand.u32 2147483647, %v288
      %v1543 = vand.u32 %v1542, 8388607
      %v1544 = vor.u32 %v1543, 8388608
      %v1545 = vsub.s32 0, %v1544
      %v1546 = vadd.s32 %v1541, 1
      %vm1547 = vcmp.gt.s32.totalorder %v1546, 0
      %v1548 = vsel %vm1547, %v1546, 0
      %v1549 = vshrl.u32 %v1548, 5
      %v1550 = vand.u32 %v1548, 31
      %v1551 = vsub.s32 32, %v1550
      %v1552 = vshrl.u32 683565275, %v1551
      %v1553 = vshll.u32 683565275, %v1550
      %v1554 = vshrl.u32 2475754826, %v1551
      %v1555 = vor.u32 %v1553, %v1554
      %v1556 = vshll.u32 2475754826, %v1550
      %v1557 = vshrl.u32 2131351028, %v1551
      %v1558 = vor.u32 %v1556, %v1557
      %v1559 = vshll.u32 2131351028, %v1550
      %v1560 = vshrl.u32 2102212464, %v1551
      %v1561 = vor.u32 %v1559, %v1560
      %v1562 = vshll.u32 2102212464, %v1550
      %v1563 = vshrl.u32 920167782, %v1551
      %v1564 = vor.u32 %v1562, %v1563
      %v1565 = vshll.u32 920167782, %v1550
      %v1566 = vshrl.u32 1326507024, %v1551
      %v1567 = vor.u32 %v1565, %v1566
      %vm1568 = vcmp.lt.s32.totalorder %v1549, 1
      %vm1569 = vcmp.lt.s32.totalorder %v1549, 2
      %vm1570 = vcmp.lt.s32.totalorder %v1549, 3
      %vm1571 = vcmp.lt.s32.totalorder %v1549, 4
      %v1572 = vsel %vm1568, %v1552, %v1555
      %v1573 = vsel %vm1571, %v1561, 2102212464
      %v1574 = vsel %vm1570, %v1558, %v1573
      %v1575 = vsel %vm1569, %v1572, %v1574
      %v1576 = vsel %vm1568, %v1555, %v1558
      %v1577 = vsel %vm1571, %v1564, 920167782
      %v1578 = vsel %vm1570, %v1561, %v1577
      %v1579 = vsel %vm1569, %v1576, %v1578
      %v1580 = vsel %vm1568, %v1558, %v1561
      %v1581 = vsel %vm1571, %v1567, 1326507024
      %v1582 = vsel %vm1570, %v1564, %v1581
      %v1583 = vsel %vm1569, %v1580, %v1582
      %v1584 = vshll.u32 %v1544, 8
      %v1585 = vand.u32 %v1584, 65535
      %v1586 = vshrl.u32 %v1584, 16
      %v1587 = vand.u32 %v1583, 65535
      %v1588 = vshrl.u32 %v1583, 16
      %v1589 = vmul.u32 %v1585, %v1587
      %v1590 = vmul.u32 %v1585, %v1588
      %v1591 = vmul.u32 %v1586, %v1587
      %v1592 = vmul.u32 %v1586, %v1588
      %v1593 = vshll.u32 %v1590, 16
      %v1594 = vshrl.u32 %v1590, 16
      %v1595 = vshll.u32 %v1591, 16
      %v1596 = vshrl.u32 %v1591, 16
      %vm1597 = vc.u32 %v1589, %v1593
      %v1598 = vsel %vm1597, 1, 0
      %v1599 = vadd.s32 %v1589, %v1593
      %v1600 = vadd.s32 %v1592, %v1598
      %vm1601 = vc.u32 %v1599, %v1595
      %v1602 = vsel %vm1601, 1, 0
      %v1603 = vadd.s32 %v1599, %v1595
      %v1604 = vadd.s32 %v1600, %v1602
      %v1605 = vadd.s32 %v1604, %v1594
      %v1606 = vadd.s32 %v1605, %v1596
      %v1607 = vand.u32 %v1584, 65535
      %v1608 = vshrl.u32 %v1584, 16
      %v1609 = vand.u32 %v1579, 65535
      %v1610 = vshrl.u32 %v1579, 16
      %v1611 = vmul.u32 %v1607, %v1609
      %v1612 = vmul.u32 %v1607, %v1610
      %v1613 = vmul.u32 %v1608, %v1609
      %v1614 = vmul.u32 %v1608, %v1610
      %v1615 = vshll.u32 %v1612, 16
      %v1616 = vshrl.u32 %v1612, 16
      %v1617 = vshll.u32 %v1613, 16
      %v1618 = vshrl.u32 %v1613, 16
      %vm1619 = vc.u32 %v1611, %v1615
      %v1620 = vsel %vm1619, 1, 0
      %v1621 = vadd.s32 %v1611, %v1615
      %v1622 = vadd.s32 %v1614, %v1620
      %vm1623 = vc.u32 %v1621, %v1617
      %v1624 = vsel %vm1623, 1, 0
      %v1625 = vadd.s32 %v1621, %v1617
      %v1626 = vadd.s32 %v1622, %v1624
      %v1627 = vadd.s32 %v1626, %v1616
      %v1628 = vadd.s32 %v1627, %v1618
      %v1629 = vmul.u32 %v1584, %v1575
      %v1630 = vadd.s32 %v1606, %v1625
      %vm1631 = vc.u32 %v1606, %v1625
      %v1632 = vadd.s32 %v1628, 1
      %v1633 = vsel %vm1631, %v1632, %v1628
      %v1634 = vadd.s32 %v1629, %v1633
      %v1635 = vadd.s32 %v1634, 536870912
      %v1636 = vshrl.u32 %v1635, 30
      %v1637 = vshll.u32 %v1636, 30
      %v1638 = vsub.s32 %v1634, %v1637
      %vm1639 = vcmp.lt.s32.totalorder %v1638, 0
      %v1640 = vsub.s32 0, %v1638
      %v1641 = vsel %vm1639, %v1640, %v1638
      %v1642 = vclz %v1641
      %v1643 = vsub.s32 %v1642, 2
      %vm1644 = vcmp.gt.s32.totalorder 0, %v1643
      %v1645 = vsel %vm1644, 0, %v1643
      %v1646 = vsub.s32 32, %v1645
      %v1647 = vshll.u32 %v1638, %v1645
      %v1648 = vshrl.u32 %v1630, %v1646
      %v1649 = vor.u32 %v1647, %v1648
      %v1650 = vsub.s32 4294967266, %v1645
      %v1651 = vadd.s32 %v1650, 127
      %v1652 = vshll.u32 %v1651, 23
      %v1653 = vor.u32 4788187, %v1652
      %v1654 = vand.u32 2147483647, %v1653
      %v1656 = vcvt.s32.f32 %v1649
      %v1657 = vmul.f32 %v1656, %v1654
      %v1658 = vxor.u32 %v1657, 2147483648
      %v1659 = vsel %vm1538, %v1658, %v1657
      %v1660 = vsub.s32 4, %v1636
      %v1661 = vsel %vm1538, %v1660, %v1636
      %v1662 = vsel %vm1537, %v288, %v1659
      %v1663 = vsel %vm1537, 0, %v1661
      %v1664 = vmul.f32 %v1662, %v1662
      %v1665 = vmul.f32 %v1664, -0.001358992
      %v1666 = vadd.f32 %v1665, 0.041655596
      %v1667 = vmul.f32 %v1664, %v1666
      %v1668 = vadd.f32 %v1667, -0.4999988
      %v1669 = vmul.f32 %v1664, %v1668
      %v1670 = vadd.f32 1.0, %v1669
      %v1671 = vmul.f32 %v1662, %v1662
      %v1672 = vmul.f32 %v1671, -0.00019511016
      %v1673 = vadd.f32 %v1672, 0.008332121
      %v1674 = vmul.f32 %v1671, %v1673
      %v1675 = vadd.f32 %v1674, -0.16666654
      %v1676 = vmul.f32 %v1671, %v1675
      %v1677 = vadd.f32 %v1676, 1.0
      %v1678 = vmul.f32 %v1677, %v1662
      %vm1679 = vweird.f32 %v288
      %v1680 = vand.u32 %v1663, 3
      %vm1681 = vcmp.lt.s32.totalorder %v1680, 2
      %vm1682 = vcmp.eq.s32.totalorder %v1680, 0
      %v1683 = vxor.u32 %v1678, 2147483648
      %v1684 = vsel %vm1682, %v1670, %v1683
      %vm1685 = vcmp.eq.s32.totalorder %v1680, 2
      %v1686 = vxor.u32 %v1670, 2147483648
      %v1687 = vsel %vm1685, %v1686, %v1678
      %v1688 = vsel %vm1681, %v1684, %v1687
      %v1689 = vsel %vm1679, nan, %v1688
      %v1690 = vand.u32 2147483647, %v289
      %vm1691 = vcmp.le.f32.partialorder %v1690, 0.7853982
      %vm1692 = vcmp.lt.s32.totalorder %v289, 0
      %v1693 = vand.u32 %v289, 2139095040
      %v1694 = vshrl.u32 %v1693, 23
      %v1695 = vsub.s32 %v1694, 127
      %v1696 = vand.u32 2147483647, %v289
      %v1697 = vand.u32 %v1696, 8388607
      %v1698 = vor.u32 %v1697, 8388608
      %v1699 = vsub.s32 0, %v1698
      %v1700 = vadd.s32 %v1695, 1
      %vm1701 = vcmp.gt.s32.totalorder %v1700, 0
      %v1702 = vsel %vm1701, %v1700, 0
      %v1703 = vshrl.u32 %v1702, 5
      %v1704 = vand.u32 %v1702, 31
      %v1705 = vsub.s32 32, %v1704
      %v1706 = vshrl.u32 683565275, %v1705
      %v1707 = vshll.u32 683565275, %v1704
      %v1708 = vshrl.u32 2475754826, %v1705
      %v1709 = vor.u32 %v1707, %v1708
      %v1710 = vshll.u32 2475754826, %v1704
      %v1711 = vshrl.u32 2131351028, %v1705
      %v1712 = vor.u32 %v1710, %v1711
      %v1713 = vshll.u32 2131351028, %v1704
      %v1714 = vshrl.u32 2102212464, %v1705
      %v1715 = vor.u32 %v1713, %v1714
      %v1716 = vshll.u32 2102212464, %v1704
      %v1717 = vshrl.u32 920167782, %v1705
      %v1718 = vor.u32 %v1716, %v1717
      %v1719 = vshll.u32 920167782, %v1704
      %v1720 = vshrl.u32 1326507024, %v1705
      %v1721 = vor.u32 %v1719, %v1720
      %vm1722 = vcmp.lt.s32.totalorder %v1703, 1
      %vm1723 = vcmp.lt.s32.totalorder %v1703, 2
      %vm1724 = vcmp.lt.s32.totalorder %v1703, 3
      %vm1725 = vcmp.lt.s32.totalorder %v1703, 4
      %v1726 = vsel %vm1722, %v1706, %v1709
      %v1727 = vsel %vm1725, %v1715, 2102212464
      %v1728 = vsel %vm1724, %v1712, %v1727
      %v1729 = vsel %vm1723, %v1726, %v1728
      %v1730 = vsel %vm1722, %v1709, %v1712
      %v1731 = vsel %vm1725, %v1718, 920167782
      %v1732 = vsel %vm1724, %v1715, %v1731
      %v1733 = vsel %vm1723, %v1730, %v1732
      %v1734 = vsel %vm1722, %v1712, %v1715
      %v1735 = vsel %vm1725, %v1721, 1326507024
      %v1736 = vsel %vm1724, %v1718, %v1735
      %v1737 = vsel %vm1723, %v1734, %v1736
      %v1738 = vshll.u32 %v1698, 8
      %v1739 = vand.u32 %v1738, 65535
      %v1740 = vshrl.u32 %v1738, 16
      %v1741 = vand.u32 %v1737, 65535
      %v1742 = vshrl.u32 %v1737, 16
      %v1743 = vmul.u32 %v1739, %v1741
      %v1744 = vmul.u32 %v1739, %v1742
      %v1745 = vmul.u32 %v1740, %v1741
      %v1746 = vmul.u32 %v1740, %v1742
      %v1747 = vshll.u32 %v1744, 16
      %v1748 = vshrl.u32 %v1744, 16
      %v1749 = vshll.u32 %v1745, 16
      %v1750 = vshrl.u32 %v1745, 16
      %vm1751 = vc.u32 %v1743, %v1747
      %v1752 = vsel %vm1751, 1, 0
      %v1753 = vadd.s32 %v1743, %v1747
      %v1754 = vadd.s32 %v1746, %v1752
      %vm1755 = vc.u32 %v1753, %v1749
      %v1756 = vsel %vm1755, 1, 0
      %v1757 = vadd.s32 %v1753, %v1749
      %v1758 = vadd.s32 %v1754, %v1756
      %v1759 = vadd.s32 %v1758, %v1748
      %v1760 = vadd.s32 %v1759, %v1750
      %v1761 = vand.u32 %v1738, 65535
      %v1762 = vshrl.u32 %v1738, 16
      %v1763 = vand.u32 %v1733, 65535
      %v1764 = vshrl.u32 %v1733, 16
      %v1765 = vmul.u32 %v1761, %v1763
      %v1766 = vmul.u32 %v1761, %v1764
      %v1767 = vmul.u32 %v1762, %v1763
      %v1768 = vmul.u32 %v1762, %v1764
      %v1769 = vshll.u32 %v1766, 16
      %v1770 = vshrl.u32 %v1766, 16
      %v1771 = vshll.u32 %v1767, 16
      %v1772 = vshrl.u32 %v1767, 16
      %vm1773 = vc.u32 %v1765, %v1769
      %v1774 = vsel %vm1773, 1, 0
      %v1775 = vadd.s32 %v1765, %v1769
      %v1776 = vadd.s32 %v1768, %v1774
      %vm1777 = vc.u32 %v1775, %v1771
      %v1778 = vsel %vm1777, 1, 0
      %v1779 = vadd.s32 %v1775, %v1771
      %v1780 = vadd.s32 %v1776, %v1778
      %v1781 = vadd.s32 %v1780, %v1770
      %v1782 = vadd.s32 %v1781, %v1772
      %v1783 = vmul.u32 %v1738, %v1729
      %v1784 = vadd.s32 %v1760, %v1779
      %vm1785 = vc.u32 %v1760, %v1779
      %v1786 = vadd.s32 %v1782, 1
      %v1787 = vsel %vm1785, %v1786, %v1782
      %v1788 = vadd.s32 %v1783, %v1787
      %v1789 = vadd.s32 %v1788, 536870912
      %v1790 = vshrl.u32 %v1789, 30
      %v1791 = vshll.u32 %v1790, 30
      %v1792 = vsub.s32 %v1788, %v1791
      %vm1793 = vcmp.lt.s32.totalorder %v1792, 0
      %v1794 = vsub.s32 0, %v1792
      %v1795 = vsel %vm1793, %v1794, %v1792
      %v1796 = vclz %v1795
      %v1797 = vsub.s32 %v1796, 2
      %vm1798 = vcmp.gt.s32.totalorder 0, %v1797
      %v1799 = vsel %vm1798, 0, %v1797
      %v1800 = vsub.s32 32, %v1799
      %v1801 = vshll.u32 %v1792, %v1799
      %v1802 = vshrl.u32 %v1784, %v1800
      %v1803 = vor.u32 %v1801, %v1802
      %v1804 = vsub.s32 4294967266, %v1799
      %v1805 = vadd.s32 %v1804, 127
      %v1806 = vshll.u32 %v1805, 23
      %v1807 = vor.u32 4788187, %v1806
      %v1808 = vand.u32 2147483647, %v1807
      %v1810 = vcvt.s32.f32 %v1803
      %v1811 = vmul.f32 %v1810, %v1808
      %v1812 = vxor.u32 %v1811, 2147483648
      %v1813 = vsel %vm1692, %v1812, %v1811
      %v1814 = vsub.s32 4, %v1790
      %v1815 = vsel %vm1692, %v1814, %v1790
      %v1816 = vsel %vm1691, %v289, %v1813
      %v1817 = vsel %vm1691, 0, %v1815
      %v1818 = vmul.f32 %v1816, %v1816
      %v1819 = vmul.f32 %v1818, -0.001358992
      %v1820 = vadd.f32 %v1819, 0.041655596
      %v1821 = vmul.f32 %v1818, %v1820
      %v1822 = vadd.f32 %v1821, -0.4999988
      %v1823 = vmul.f32 %v1818, %v1822
      %v1824 = vadd.f32 1.0, %v1823
      %v1825 = vmul.f32 %v1816, %v1816
      %v1826 = vmul.f32 %v1825, -0.00019511016
      %v1827 = vadd.f32 %v1826, 0.008332121
      %v1828 = vmul.f32 %v1825, %v1827
      %v1829 = vadd.f32 %v1828, -0.16666654
      %v1830 = vmul.f32 %v1825, %v1829
      %v1831 = vadd.f32 %v1830, 1.0
      %v1832 = vmul.f32 %v1831, %v1816
      %vm1833 = vweird.f32 %v289
      %v1834 = vand.u32 %v1817, 3
      %vm1835 = vcmp.lt.s32.totalorder %v1834, 2
      %vm1836 = vcmp.eq.s32.totalorder %v1834, 0
      %v1837 = vxor.u32 %v1832, 2147483648
      %v1838 = vsel %vm1836, %v1824, %v1837
      %vm1839 = vcmp.eq.s32.totalorder %v1834, 2
      %v1840 = vxor.u32 %v1824, 2147483648
      %v1841 = vsel %vm1839, %v1840, %v1832
      %v1842 = vsel %vm1835, %v1838, %v1841
      %v1843 = vsel %vm1833, nan, %v1842
      %v1844 = vand.u32 2147483647, %v290
      %vm1845 = vcmp.le.f32.partialorder %v1844, 0.7853982
      %vm1846 = vcmp.lt.s32.totalorder %v290, 0
      %v1847 = vand.u32 %v290, 2139095040
      %v1848 = vshrl.u32 %v1847, 23
      %v1849 = vsub.s32 %v1848, 127
      %v1850 = vand.u32 2147483647, %v290
      %v1851 = vand.u32 %v1850, 8388607
      %v1852 = vor.u32 %v1851, 8388608
      %v1853 = vsub.s32 0, %v1852
      %v1854 = vadd.s32 %v1849, 1
      %vm1855 = vcmp.gt.s32.totalorder %v1854, 0
      %v1856 = vsel %vm1855, %v1854, 0
      %v1857 = vshrl.u32 %v1856, 5
      %v1858 = vand.u32 %v1856, 31
      %v1859 = vsub.s32 32, %v1858
      %v1860 = vshrl.u32 683565275, %v1859
      %v1861 = vshll.u32 683565275, %v1858
      %v1862 = vshrl.u32 2475754826, %v1859
      %v1863 = vor.u32 %v1861, %v1862
      %v1864 = vshll.u32 2475754826, %v1858
      %v1865 = vshrl.u32 2131351028, %v1859
      %v1866 = vor.u32 %v1864, %v1865
      %v1867 = vshll.u32 2131351028, %v1858
      %v1868 = vshrl.u32 2102212464, %v1859
      %v1869 = vor.u32 %v1867, %v1868
      %v1870 = vshll.u32 2102212464, %v1858
      %v1871 = vshrl.u32 920167782, %v1859
      %v1872 = vor.u32 %v1870, %v1871
      %v1873 = vshll.u32 920167782, %v1858
      %v1874 = vshrl.u32 1326507024, %v1859
      %v1875 = vor.u32 %v1873, %v1874
      %vm1876 = vcmp.lt.s32.totalorder %v1857, 1
      %vm1877 = vcmp.lt.s32.totalorder %v1857, 2
      %vm1878 = vcmp.lt.s32.totalorder %v1857, 3
      %vm1879 = vcmp.lt.s32.totalorder %v1857, 4
      %v1880 = vsel %vm1876, %v1860, %v1863
      %v1881 = vsel %vm1879, %v1869, 2102212464
      %v1882 = vsel %vm1878, %v1866, %v1881
      %v1883 = vsel %vm1877, %v1880, %v1882
      %v1884 = vsel %vm1876, %v1863, %v1866
      %v1885 = vsel %vm1879, %v1872, 920167782
      %v1886 = vsel %vm1878, %v1869, %v1885
      %v1887 = vsel %vm1877, %v1884, %v1886
      %v1888 = vsel %vm1876, %v1866, %v1869
      %v1889 = vsel %vm1879, %v1875, 1326507024
      %v1890 = vsel %vm1878, %v1872, %v1889
      %v1891 = vsel %vm1877, %v1888, %v1890
      %v1892 = vshll.u32 %v1852, 8
      %v1893 = vand.u32 %v1892, 65535
      %v1894 = vshrl.u32 %v1892, 16
      %v1895 = vand.u32 %v1891, 65535
      %v1896 = vshrl.u32 %v1891, 16
      %v1897 = vmul.u32 %v1893, %v1895
      %v1898 = vmul.u32 %v1893, %v1896
      %v1899 = vmul.u32 %v1894, %v1895
      %v1900 = vmul.u32 %v1894, %v1896
      %v1901 = vshll.u32 %v1898, 16
      %v1902 = vshrl.u32 %v1898, 16
      %v1903 = vshll.u32 %v1899, 16
      %v1904 = vshrl.u32 %v1899, 16
      %vm1905 = vc.u32 %v1897, %v1901
      %v1906 = vsel %vm1905, 1, 0
      %v1907 = vadd.s32 %v1897, %v1901
      %v1908 = vadd.s32 %v1900, %v1906
      %vm1909 = vc.u32 %v1907, %v1903
      %v1910 = vsel %vm1909, 1, 0
      %v1911 = vadd.s32 %v1907, %v1903
      %v1912 = vadd.s32 %v1908, %v1910
      %v1913 = vadd.s32 %v1912, %v1902
      %v1914 = vadd.s32 %v1913, %v1904
      %v1915 = vand.u32 %v1892, 65535
      %v1916 = vshrl.u32 %v1892, 16
      %v1917 = vand.u32 %v1887, 65535
      %v1918 = vshrl.u32 %v1887, 16
      %v1919 = vmul.u32 %v1915, %v1917
      %v1920 = vmul.u32 %v1915, %v1918
      %v1921 = vmul.u32 %v1916, %v1917
      %v1922 = vmul.u32 %v1916, %v1918
      %v1923 = vshll.u32 %v1920, 16
      %v1924 = vshrl.u32 %v1920, 16
      %v1925 = vshll.u32 %v1921, 16
      %v1926 = vshrl.u32 %v1921, 16
      %vm1927 = vc.u32 %v1919, %v1923
      %v1928 = vsel %vm1927, 1, 0
      %v1929 = vadd.s32 %v1919, %v1923
      %v1930 = vadd.s32 %v1922, %v1928
      %vm1931 = vc.u32 %v1929, %v1925
      %v1932 = vsel %vm1931, 1, 0
      %v1933 = vadd.s32 %v1929, %v1925
      %v1934 = vadd.s32 %v1930, %v1932
      %v1935 = vadd.s32 %v1934, %v1924
      %v1936 = vadd.s32 %v1935, %v1926
      %v1937 = vmul.u32 %v1892, %v1883
      %v1938 = vadd.s32 %v1914, %v1933
      %vm1939 = vc.u32 %v1914, %v1933
      %v1940 = vadd.s32 %v1936, 1
      %v1941 = vsel %vm1939, %v1940, %v1936
      %v1942 = vadd.s32 %v1937, %v1941
      %v1943 = vadd.s32 %v1942, 536870912
      %v1944 = vshrl.u32 %v1943, 30
      %v1945 = vshll.u32 %v1944, 30
      %v1946 = vsub.s32 %v1942, %v1945
      %vm1947 = vcmp.lt.s32.totalorder %v1946, 0
      %v1948 = vsub.s32 0, %v1946
      %v1949 = vsel %vm1947, %v1948, %v1946
      %v1950 = vclz %v1949
      %v1951 = vsub.s32 %v1950, 2
      %vm1952 = vcmp.gt.s32.totalorder 0, %v1951
      %v1953 = vsel %vm1952, 0, %v1951
      %v1954 = vsub.s32 32, %v1953
      %v1955 = vshll.u32 %v1946, %v1953
      %v1956 = vshrl.u32 %v1938, %v1954
      %v1957 = vor.u32 %v1955, %v1956
      %v1958 = vsub.s32 4294967266, %v1953
      %v1959 = vadd.s32 %v1958, 127
      %v1960 = vshll.u32 %v1959, 23
      %v1961 = vor.u32 4788187, %v1960
      %v1962 = vand.u32 2147483647, %v1961
      %v1964 = vcvt.s32.f32 %v1957
      %v1965 = vmul.f32 %v1964, %v1962
      %v1966 = vxor.u32 %v1965, 2147483648
      %v1967 = vsel %vm1846, %v1966, %v1965
      %v1968 = vsub.s32 4, %v1944
      %v1969 = vsel %vm1846, %v1968, %v1944
      %v1970 = vsel %vm1845, %v290, %v1967
      %v1971 = vsel %vm1845, 0, %v1969
      %v1972 = vmul.f32 %v1970, %v1970
      %v1973 = vmul.f32 %v1972, -0.001358992
      %v1974 = vadd.f32 %v1973, 0.041655596
      %v1975 = vmul.f32 %v1972, %v1974
      %v1976 = vadd.f32 %v1975, -0.4999988
      %v1977 = vmul.f32 %v1972, %v1976
      %v1978 = vadd.f32 1.0, %v1977
      %v1979 = vmul.f32 %v1970, %v1970
      %v1980 = vmul.f32 %v1979, -0.00019511016
      %v1981 = vadd.f32 %v1980, 0.008332121
      %v1982 = vmul.f32 %v1979, %v1981
      %v1983 = vadd.f32 %v1982, -0.16666654
      %v1984 = vmul.f32 %v1979, %v1983
      %v1985 = vadd.f32 %v1984, 1.0
      %v1986 = vmul.f32 %v1985, %v1970
      %vm1987 = vweird.f32 %v290
      %v1988 = vand.u32 %v1971, 3
      %vm1989 = vcmp.lt.s32.totalorder %v1988, 2
      %vm1990 = vcmp.eq.s32.totalorder %v1988, 0
      %v1991 = vxor.u32 %v1986, 2147483648
      %v1992 = vsel %vm1990, %v1978, %v1991
      %vm1993 = vcmp.eq.s32.totalorder %v1988, 2
      %v1994 = vxor.u32 %v1978, 2147483648
      %v1995 = vsel %vm1993, %v1994, %v1986
      %v1996 = vsel %vm1989, %v1992, %v1995
      %v1997 = vsel %vm1987, nan, %v1996
      %v1998 = vand.u32 2147483647, %v291
      %vm1999 = vcmp.le.f32.partialorder %v1998, 0.7853982
      %vm2000 = vcmp.lt.s32.totalorder %v291, 0
      %v2001 = vand.u32 %v291, 2139095040
      %v2002 = vshrl.u32 %v2001, 23
      %v2003 = vsub.s32 %v2002, 127
      %v2004 = vand.u32 2147483647, %v291
      %v2005 = vand.u32 %v2004, 8388607
      %v2006 = vor.u32 %v2005, 8388608
      %v2007 = vsub.s32 0, %v2006
      %v2008 = vadd.s32 %v2003, 1
      %vm2009 = vcmp.gt.s32.totalorder %v2008, 0
      %v2010 = vsel %vm2009, %v2008, 0
      %v2011 = vshrl.u32 %v2010, 5
      %v2012 = vand.u32 %v2010, 31
      %v2013 = vsub.s32 32, %v2012
      %v2014 = vshrl.u32 683565275, %v2013
      %v2015 = vshll.u32 683565275, %v2012
      %v2016 = vshrl.u32 2475754826, %v2013
      %v2017 = vor.u32 %v2015, %v2016
      %v2018 = vshll.u32 2475754826, %v2012
      %v2019 = vshrl.u32 2131351028, %v2013
      %v2020 = vor.u32 %v2018, %v2019
      %v2021 = vshll.u32 2131351028, %v2012
      %v2022 = vshrl.u32 2102212464, %v2013
      %v2023 = vor.u32 %v2021, %v2022
      %v2024 = vshll.u32 2102212464, %v2012
      %v2025 = vshrl.u32 920167782, %v2013
      %v2026 = vor.u32 %v2024, %v2025
      %v2027 = vshll.u32 920167782, %v2012
      %v2028 = vshrl.u32 1326507024, %v2013
      %v2029 = vor.u32 %v2027, %v2028
      %vm2030 = vcmp.lt.s32.totalorder %v2011, 1
      %vm2031 = vcmp.lt.s32.totalorder %v2011, 2
      %vm2032 = vcmp.lt.s32.totalorder %v2011, 3
      %vm2033 = vcmp.lt.s32.totalorder %v2011, 4
      %v2034 = vsel %vm2030, %v2014, %v2017
      %v2035 = vsel %vm2033, %v2023, 2102212464
      %v2036 = vsel %vm2032, %v2020, %v2035
      %v2037 = vsel %vm2031, %v2034, %v2036
      %v2038 = vsel %vm2030, %v2017, %v2020
      %v2039 = vsel %vm2033, %v2026, 920167782
      %v2040 = vsel %vm2032, %v2023, %v2039
      %v2041 = vsel %vm2031, %v2038, %v2040
      %v2042 = vsel %vm2030, %v2020, %v2023
      %v2043 = vsel %vm2033, %v2029, 1326507024
      %v2044 = vsel %vm2032, %v2026, %v2043
      %v2045 = vsel %vm2031, %v2042, %v2044
      %v2046 = vshll.u32 %v2006, 8
      %v2047 = vand.u32 %v2046, 65535
      %v2048 = vshrl.u32 %v2046, 16
      %v2049 = vand.u32 %v2045, 65535
      %v2050 = vshrl.u32 %v2045, 16
      %v2051 = vmul.u32 %v2047, %v2049
      %v2052 = vmul.u32 %v2047, %v2050
      %v2053 = vmul.u32 %v2048, %v2049
      %v2054 = vmul.u32 %v2048, %v2050
      %v2055 = vshll.u32 %v2052, 16
      %v2056 = vshrl.u32 %v2052, 16
      %v2057 = vshll.u32 %v2053, 16
      %v2058 = vshrl.u32 %v2053, 16
      %vm2059 = vc.u32 %v2051, %v2055
      %v2060 = vsel %vm2059, 1, 0
      %v2061 = vadd.s32 %v2051, %v2055
      %v2062 = vadd.s32 %v2054, %v2060
      %vm2063 = vc.u32 %v2061, %v2057
      %v2064 = vsel %vm2063, 1, 0
      %v2065 = vadd.s32 %v2061, %v2057
      %v2066 = vadd.s32 %v2062, %v2064
      %v2067 = vadd.s32 %v2066, %v2056
      %v2068 = vadd.s32 %v2067, %v2058
      %v2069 = vand.u32 %v2046, 65535
      %v2070 = vshrl.u32 %v2046, 16
      %v2071 = vand.u32 %v2041, 65535
      %v2072 = vshrl.u32 %v2041, 16
      %v2073 = vmul.u32 %v2069, %v2071
      %v2074 = vmul.u32 %v2069, %v2072
      %v2075 = vmul.u32 %v2070, %v2071
      %v2076 = vmul.u32 %v2070, %v2072
      %v2077 = vshll.u32 %v2074, 16
      %v2078 = vshrl.u32 %v2074, 16
      %v2079 = vshll.u32 %v2075, 16
      %v2080 = vshrl.u32 %v2075, 16
      %vm2081 = vc.u32 %v2073, %v2077
      %v2082 = vsel %vm2081, 1, 0
      %v2083 = vadd.s32 %v2073, %v2077
      %v2084 = vadd.s32 %v2076, %v2082
      %vm2085 = vc.u32 %v2083, %v2079
      %v2086 = vsel %vm2085, 1, 0
      %v2087 = vadd.s32 %v2083, %v2079
      %v2088 = vadd.s32 %v2084, %v2086
      %v2089 = vadd.s32 %v2088, %v2078
      %v2090 = vadd.s32 %v2089, %v2080
      %v2091 = vmul.u32 %v2046, %v2037
      %v2092 = vadd.s32 %v2068, %v2087
      %vm2093 = vc.u32 %v2068, %v2087
      %v2094 = vadd.s32 %v2090, 1
      %v2095 = vsel %vm2093, %v2094, %v2090
      %v2096 = vadd.s32 %v2091, %v2095
      %v2097 = vadd.s32 %v2096, 536870912
      %v2098 = vshrl.u32 %v2097, 30
      %v2099 = vshll.u32 %v2098, 30
      %v2100 = vsub.s32 %v2096, %v2099
      %vm2101 = vcmp.lt.s32.totalorder %v2100, 0
      %v2102 = vsub.s32 0, %v2100
      %v2103 = vsel %vm2101, %v2102, %v2100
      %v2104 = vclz %v2103
      %v2105 = vsub.s32 %v2104, 2
      %vm2106 = vcmp.gt.s32.totalorder 0, %v2105
      %v2107 = vsel %vm2106, 0, %v2105
      %v2108 = vsub.s32 32, %v2107
      %v2109 = vshll.u32 %v2100, %v2107
      %v2110 = vshrl.u32 %v2092, %v2108
      %v2111 = vor.u32 %v2109, %v2110
      %v2112 = vsub.s32 4294967266, %v2107
      %v2113 = vadd.s32 %v2112, 127
      %v2114 = vshll.u32 %v2113, 23
      %v2115 = vor.u32 4788187, %v2114
      %v2116 = vand.u32 2147483647, %v2115
      %v2118 = vcvt.s32.f32 %v2111
      %v2119 = vmul.f32 %v2118, %v2116
      %v2120 = vxor.u32 %v2119, 2147483648
      %v2121 = vsel %vm2000, %v2120, %v2119
      %v2122 = vsub.s32 4, %v2098
      %v2123 = vsel %vm2000, %v2122, %v2098
      %v2124 = vsel %vm1999, %v291, %v2121
      %v2125 = vsel %vm1999, 0, %v2123
      %v2126 = vmul.f32 %v2124, %v2124
      %v2127 = vmul.f32 %v2126, -0.001358992
      %v2128 = vadd.f32 %v2127, 0.041655596
      %v2129 = vmul.f32 %v2126, %v2128
      %v2130 = vadd.f32 %v2129, -0.4999988
      %v2131 = vmul.f32 %v2126, %v2130
      %v2132 = vadd.f32 1.0, %v2131
      %v2133 = vmul.f32 %v2124, %v2124
      %v2134 = vmul.f32 %v2133, -0.00019511016
      %v2135 = vadd.f32 %v2134, 0.008332121
      %v2136 = vmul.f32 %v2133, %v2135
      %v2137 = vadd.f32 %v2136, -0.16666654
      %v2138 = vmul.f32 %v2133, %v2137
      %v2139 = vadd.f32 %v2138, 1.0
      %v2140 = vmul.f32 %v2139, %v2124
      %vm2141 = vweird.f32 %v291
      %v2142 = vand.u32 %v2125, 3
      %vm2143 = vcmp.lt.s32.totalorder %v2142, 2
      %vm2144 = vcmp.eq.s32.totalorder %v2142, 0
      %v2145 = vxor.u32 %v2140, 2147483648
      %v2146 = vsel %vm2144, %v2132, %v2145
      %vm2147 = vcmp.eq.s32.totalorder %v2142, 2
      %v2148 = vxor.u32 %v2132, 2147483648
      %v2149 = vsel %vm2147, %v2148, %v2140
      %v2150 = vsel %vm2143, %v2146, %v2149
      %v2151 = vsel %vm2141, nan, %v2150
      %v2152 = vand.u32 2147483647, %v292
      %vm2153 = vcmp.le.f32.partialorder %v2152, 0.7853982
      %vm2154 = vcmp.lt.s32.totalorder %v292, 0
      %v2155 = vand.u32 %v292, 2139095040
      %v2156 = vshrl.u32 %v2155, 23
      %v2157 = vsub.s32 %v2156, 127
      %v2158 = vand.u32 2147483647, %v292
      %v2159 = vand.u32 %v2158, 8388607
      %v2160 = vor.u32 %v2159, 8388608
      %v2161 = vsub.s32 0, %v2160
      %v2162 = vadd.s32 %v2157, 1
      %vm2163 = vcmp.gt.s32.totalorder %v2162, 0
      %v2164 = vsel %vm2163, %v2162, 0
      %v2165 = vshrl.u32 %v2164, 5
      %v2166 = vand.u32 %v2164, 31
      %v2167 = vsub.s32 32, %v2166
      %v2168 = vshrl.u32 683565275, %v2167
      %v2169 = vshll.u32 683565275, %v2166
      %v2170 = vshrl.u32 2475754826, %v2167
      %v2171 = vor.u32 %v2169, %v2170
      %v2172 = vshll.u32 2475754826, %v2166
      %v2173 = vshrl.u32 2131351028, %v2167
      %v2174 = vor.u32 %v2172, %v2173
      %v2175 = vshll.u32 2131351028, %v2166
      %v2176 = vshrl.u32 2102212464, %v2167
      %v2177 = vor.u32 %v2175, %v2176
      %v2178 = vshll.u32 2102212464, %v2166
      %v2179 = vshrl.u32 920167782, %v2167
      %v2180 = vor.u32 %v2178, %v2179
      %v2181 = vshll.u32 920167782, %v2166
      %v2182 = vshrl.u32 1326507024, %v2167
      %v2183 = vor.u32 %v2181, %v2182
      %vm2184 = vcmp.lt.s32.totalorder %v2165, 1
      %vm2185 = vcmp.lt.s32.totalorder %v2165, 2
      %vm2186 = vcmp.lt.s32.totalorder %v2165, 3
      %vm2187 = vcmp.lt.s32.totalorder %v2165, 4
      %v2188 = vsel %vm2184, %v2168, %v2171
      %v2189 = vsel %vm2187, %v2177, 2102212464
      %v2190 = vsel %vm2186, %v2174, %v2189
      %v2191 = vsel %vm2185, %v2188, %v2190
      %v2192 = vsel %vm2184, %v2171, %v2174
      %v2193 = vsel %vm2187, %v2180, 920167782
      %v2194 = vsel %vm2186, %v2177, %v2193
      %v2195 = vsel %vm2185, %v2192, %v2194
      %v2196 = vsel %vm2184, %v2174, %v2177
      %v2197 = vsel %vm2187, %v2183, 1326507024
      %v2198 = vsel %vm2186, %v2180, %v2197
      %v2199 = vsel %vm2185, %v2196, %v2198
      %v2200 = vshll.u32 %v2160, 8
      %v2201 = vand.u32 %v2200, 65535
      %v2202 = vshrl.u32 %v2200, 16
      %v2203 = vand.u32 %v2199, 65535
      %v2204 = vshrl.u32 %v2199, 16
      %v2205 = vmul.u32 %v2201, %v2203
      %v2206 = vmul.u32 %v2201, %v2204
      %v2207 = vmul.u32 %v2202, %v2203
      %v2208 = vmul.u32 %v2202, %v2204
      %v2209 = vshll.u32 %v2206, 16
      %v2210 = vshrl.u32 %v2206, 16
      %v2211 = vshll.u32 %v2207, 16
      %v2212 = vshrl.u32 %v2207, 16
      %vm2213 = vc.u32 %v2205, %v2209
      %v2214 = vsel %vm2213, 1, 0
      %v2215 = vadd.s32 %v2205, %v2209
      %v2216 = vadd.s32 %v2208, %v2214
      %vm2217 = vc.u32 %v2215, %v2211
      %v2218 = vsel %vm2217, 1, 0
      %v2219 = vadd.s32 %v2215, %v2211
      %v2220 = vadd.s32 %v2216, %v2218
      %v2221 = vadd.s32 %v2220, %v2210
      %v2222 = vadd.s32 %v2221, %v2212
      %v2223 = vand.u32 %v2200, 65535
      %v2224 = vshrl.u32 %v2200, 16
      %v2225 = vand.u32 %v2195, 65535
      %v2226 = vshrl.u32 %v2195, 16
      %v2227 = vmul.u32 %v2223, %v2225
      %v2228 = vmul.u32 %v2223, %v2226
      %v2229 = vmul.u32 %v2224, %v2225
      %v2230 = vmul.u32 %v2224, %v2226
      %v2231 = vshll.u32 %v2228, 16
      %v2232 = vshrl.u32 %v2228, 16
      %v2233 = vshll.u32 %v2229, 16
      %v2234 = vshrl.u32 %v2229, 16
      %vm2235 = vc.u32 %v2227, %v2231
      %v2236 = vsel %vm2235, 1, 0
      %v2237 = vadd.s32 %v2227, %v2231
      %v2238 = vadd.s32 %v2230, %v2236
      %vm2239 = vc.u32 %v2237, %v2233
      %v2240 = vsel %vm2239, 1, 0
      %v2241 = vadd.s32 %v2237, %v2233
      %v2242 = vadd.s32 %v2238, %v2240
      %v2243 = vadd.s32 %v2242, %v2232
      %v2244 = vadd.s32 %v2243, %v2234
      %v2245 = vmul.u32 %v2200, %v2191
      %v2246 = vadd.s32 %v2222, %v2241
      %vm2247 = vc.u32 %v2222, %v2241
      %v2248 = vadd.s32 %v2244, 1
      %v2249 = vsel %vm2247, %v2248, %v2244
      %v2250 = vadd.s32 %v2245, %v2249
      %v2251 = vadd.s32 %v2250, 536870912
      %v2252 = vshrl.u32 %v2251, 30
      %v2253 = vshll.u32 %v2252, 30
      %v2254 = vsub.s32 %v2250, %v2253
      %vm2255 = vcmp.lt.s32.totalorder %v2254, 0
      %v2256 = vsub.s32 0, %v2254
      %v2257 = vsel %vm2255, %v2256, %v2254
      %v2258 = vclz %v2257
      %v2259 = vsub.s32 %v2258, 2
      %vm2260 = vcmp.gt.s32.totalorder 0, %v2259
      %v2261 = vsel %vm2260, 0, %v2259
      %v2262 = vsub.s32 32, %v2261
      %v2263 = vshll.u32 %v2254, %v2261
      %v2264 = vshrl.u32 %v2246, %v2262
      %v2265 = vor.u32 %v2263, %v2264
      %v2266 = vsub.s32 4294967266, %v2261
      %v2267 = vadd.s32 %v2266, 127
      %v2268 = vshll.u32 %v2267, 23
      %v2269 = vor.u32 4788187, %v2268
      %v2270 = vand.u32 2147483647, %v2269
      %v2272 = vcvt.s32.f32 %v2265
      %v2273 = vmul.f32 %v2272, %v2270
      %v2274 = vxor.u32 %v2273, 2147483648
      %v2275 = vsel %vm2154, %v2274, %v2273
      %v2276 = vsub.s32 4, %v2252
      %v2277 = vsel %vm2154, %v2276, %v2252
      %v2278 = vsel %vm2153, %v292, %v2275
      %v2279 = vsel %vm2153, 0, %v2277
      %v2280 = vmul.f32 %v2278, %v2278
      %v2281 = vmul.f32 %v2280, -0.001358992
      %v2282 = vadd.f32 %v2281, 0.041655596
      %v2283 = vmul.f32 %v2280, %v2282
      %v2284 = vadd.f32 %v2283, -0.4999988
      %v2285 = vmul.f32 %v2280, %v2284
      %v2286 = vadd.f32 1.0, %v2285
      %v2287 = vmul.f32 %v2278, %v2278
      %v2288 = vmul.f32 %v2287, -0.00019511016
      %v2289 = vadd.f32 %v2288, 0.008332121
      %v2290 = vmul.f32 %v2287, %v2289
      %v2291 = vadd.f32 %v2290, -0.16666654
      %v2292 = vmul.f32 %v2287, %v2291
      %v2293 = vadd.f32 %v2292, 1.0
      %v2294 = vmul.f32 %v2293, %v2278
      %vm2295 = vweird.f32 %v292
      %v2296 = vand.u32 %v2279, 3
      %vm2297 = vcmp.lt.s32.totalorder %v2296, 2
      %vm2298 = vcmp.eq.s32.totalorder %v2296, 0
      %v2299 = vxor.u32 %v2294, 2147483648
      %v2300 = vsel %vm2298, %v2286, %v2299
      %vm2301 = vcmp.eq.s32.totalorder %v2296, 2
      %v2302 = vxor.u32 %v2286, 2147483648
      %v2303 = vsel %vm2301, %v2302, %v2294
      %v2304 = vsel %vm2297, %v2300, %v2303
      %v2305 = vsel %vm2295, nan, %v2304
      %v2306 = vand.u32 2147483647, %v293
      %vm2307 = vcmp.le.f32.partialorder %v2306, 0.7853982
      %vm2308 = vcmp.lt.s32.totalorder %v293, 0
      %v2309 = vand.u32 %v293, 2139095040
      %v2310 = vshrl.u32 %v2309, 23
      %v2311 = vsub.s32 %v2310, 127
      %v2312 = vand.u32 2147483647, %v293
      %v2313 = vand.u32 %v2312, 8388607
      %v2314 = vor.u32 %v2313, 8388608
      %v2315 = vsub.s32 0, %v2314
      %v2316 = vadd.s32 %v2311, 1
      %vm2317 = vcmp.gt.s32.totalorder %v2316, 0
      %v2318 = vsel %vm2317, %v2316, 0
      %v2319 = vshrl.u32 %v2318, 5
      %v2320 = vand.u32 %v2318, 31
      %v2321 = vsub.s32 32, %v2320
      %v2322 = vshrl.u32 683565275, %v2321
      %v2323 = vshll.u32 683565275, %v2320
      %v2324 = vshrl.u32 2475754826, %v2321
      %v2325 = vor.u32 %v2323, %v2324
      %v2326 = vshll.u32 2475754826, %v2320
      %v2327 = vshrl.u32 2131351028, %v2321
      %v2328 = vor.u32 %v2326, %v2327
      %v2329 = vshll.u32 2131351028, %v2320
      %v2330 = vshrl.u32 2102212464, %v2321
      %v2331 = vor.u32 %v2329, %v2330
      %v2332 = vshll.u32 2102212464, %v2320
      %v2333 = vshrl.u32 920167782, %v2321
      %v2334 = vor.u32 %v2332, %v2333
      %v2335 = vshll.u32 920167782, %v2320
      %v2336 = vshrl.u32 1326507024, %v2321
      %v2337 = vor.u32 %v2335, %v2336
      %vm2338 = vcmp.lt.s32.totalorder %v2319, 1
      %vm2339 = vcmp.lt.s32.totalorder %v2319, 2
      %vm2340 = vcmp.lt.s32.totalorder %v2319, 3
      %vm2341 = vcmp.lt.s32.totalorder %v2319, 4
      %v2342 = vsel %vm2338, %v2322, %v2325
      %v2343 = vsel %vm2341, %v2331, 2102212464
      %v2344 = vsel %vm2340, %v2328, %v2343
      %v2345 = vsel %vm2339, %v2342, %v2344
      %v2346 = vsel %vm2338, %v2325, %v2328
      %v2347 = vsel %vm2341, %v2334, 920167782
      %v2348 = vsel %vm2340, %v2331, %v2347
      %v2349 = vsel %vm2339, %v2346, %v2348
      %v2350 = vsel %vm2338, %v2328, %v2331
      %v2351 = vsel %vm2341, %v2337, 1326507024
      %v2352 = vsel %vm2340, %v2334, %v2351
      %v2353 = vsel %vm2339, %v2350, %v2352
      %v2354 = vshll.u32 %v2314, 8
      %v2355 = vand.u32 %v2354, 65535
      %v2356 = vshrl.u32 %v2354, 16
      %v2357 = vand.u32 %v2353, 65535
      %v2358 = vshrl.u32 %v2353, 16
      %v2359 = vmul.u32 %v2355, %v2357
      %v2360 = vmul.u32 %v2355, %v2358
      %v2361 = vmul.u32 %v2356, %v2357
      %v2362 = vmul.u32 %v2356, %v2358
      %v2363 = vshll.u32 %v2360, 16
      %v2364 = vshrl.u32 %v2360, 16
      %v2365 = vshll.u32 %v2361, 16
      %v2366 = vshrl.u32 %v2361, 16
      %vm2367 = vc.u32 %v2359, %v2363
      %v2368 = vsel %vm2367, 1, 0
      %v2369 = vadd.s32 %v2359, %v2363
      %v2370 = vadd.s32 %v2362, %v2368
      %vm2371 = vc.u32 %v2369, %v2365
      %v2372 = vsel %vm2371, 1, 0
      %v2373 = vadd.s32 %v2369, %v2365
      %v2374 = vadd.s32 %v2370, %v2372
      %v2375 = vadd.s32 %v2374, %v2364
      %v2376 = vadd.s32 %v2375, %v2366
      %v2377 = vand.u32 %v2354, 65535
      %v2378 = vshrl.u32 %v2354, 16
      %v2379 = vand.u32 %v2349, 65535
      %v2380 = vshrl.u32 %v2349, 16
      %v2381 = vmul.u32 %v2377, %v2379
      %v2382 = vmul.u32 %v2377, %v2380
      %v2383 = vmul.u32 %v2378, %v2379
      %v2384 = vmul.u32 %v2378, %v2380
      %v2385 = vshll.u32 %v2382, 16
      %v2386 = vshrl.u32 %v2382, 16
      %v2387 = vshll.u32 %v2383, 16
      %v2388 = vshrl.u32 %v2383, 16
      %vm2389 = vc.u32 %v2381, %v2385
      %v2390 = vsel %vm2389, 1, 0
      %v2391 = vadd.s32 %v2381, %v2385
      %v2392 = vadd.s32 %v2384, %v2390
      %vm2393 = vc.u32 %v2391, %v2387
      %v2394 = vsel %vm2393, 1, 0
      %v2395 = vadd.s32 %v2391, %v2387
      %v2396 = vadd.s32 %v2392, %v2394
      %v2397 = vadd.s32 %v2396, %v2386
      %v2398 = vadd.s32 %v2397, %v2388
      %v2399 = vmul.u32 %v2354, %v2345
      %v2400 = vadd.s32 %v2376, %v2395
      %vm2401 = vc.u32 %v2376, %v2395
      %v2402 = vadd.s32 %v2398, 1
      %v2403 = vsel %vm2401, %v2402, %v2398
      %v2404 = vadd.s32 %v2399, %v2403
      %v2405 = vadd.s32 %v2404, 536870912
      %v2406 = vshrl.u32 %v2405, 30
      %v2407 = vshll.u32 %v2406, 30
      %v2408 = vsub.s32 %v2404, %v2407
      %vm2409 = vcmp.lt.s32.totalorder %v2408, 0
      %v2410 = vsub.s32 0, %v2408
      %v2411 = vsel %vm2409, %v2410, %v2408
      %v2412 = vclz %v2411
      %v2413 = vsub.s32 %v2412, 2
      %vm2414 = vcmp.gt.s32.totalorder 0, %v2413
      %v2415 = vsel %vm2414, 0, %v2413
      %v2416 = vsub.s32 32, %v2415
      %v2417 = vshll.u32 %v2408, %v2415
      %v2418 = vshrl.u32 %v2400, %v2416
      %v2419 = vor.u32 %v2417, %v2418
      %v2420 = vsub.s32 4294967266, %v2415
      %v2421 = vadd.s32 %v2420, 127
      %v2422 = vshll.u32 %v2421, 23
      %v2423 = vor.u32 4788187, %v2422
      %v2424 = vand.u32 2147483647, %v2423
      %v2426 = vcvt.s32.f32 %v2419
      %v2427 = vmul.f32 %v2426, %v2424
      %v2428 = vxor.u32 %v2427, 2147483648
      %v2429 = vsel %vm2308, %v2428, %v2427
      %v2430 = vsub.s32 4, %v2406
      %v2431 = vsel %vm2308, %v2430, %v2406
      %v2432 = vsel %vm2307, %v293, %v2429
      %v2433 = vsel %vm2307, 0, %v2431
      %v2434 = vmul.f32 %v2432, %v2432
      %v2435 = vmul.f32 %v2434, -0.001358992
      %v2436 = vadd.f32 %v2435, 0.041655596
      %v2437 = vmul.f32 %v2434, %v2436
      %v2438 = vadd.f32 %v2437, -0.4999988
      %v2439 = vmul.f32 %v2434, %v2438
      %v2440 = vadd.f32 1.0, %v2439
      %v2441 = vmul.f32 %v2432, %v2432
      %v2442 = vmul.f32 %v2441, -0.00019511016
      %v2443 = vadd.f32 %v2442, 0.008332121
      %v2444 = vmul.f32 %v2441, %v2443
      %v2445 = vadd.f32 %v2444, -0.16666654
      %v2446 = vmul.f32 %v2441, %v2445
      %v2447 = vadd.f32 %v2446, 1.0
      %v2448 = vmul.f32 %v2447, %v2432
      %vm2449 = vweird.f32 %v293
      %v2450 = vand.u32 %v2433, 3
      %vm2451 = vcmp.lt.s32.totalorder %v2450, 2
      %vm2452 = vcmp.eq.s32.totalorder %v2450, 0
      %v2453 = vxor.u32 %v2448, 2147483648
      %v2454 = vsel %vm2452, %v2440, %v2453
      %vm2455 = vcmp.eq.s32.totalorder %v2450, 2
      %v2456 = vxor.u32 %v2440, 2147483648
      %v2457 = vsel %vm2455, %v2456, %v2448
      %v2458 = vsel %vm2451, %v2454, %v2457
      %v2459 = vsel %vm2449, nan, %v2458
      %v2460 = vand.u32 2147483647, %v294
      %vm2461 = vcmp.le.f32.partialorder %v2460, 0.7853982
      %vm2462 = vcmp.lt.s32.totalorder %v294, 0
      %v2463 = vand.u32 %v294, 2139095040
      %v2464 = vshrl.u32 %v2463, 23
      %v2465 = vsub.s32 %v2464, 127
      %v2466 = vand.u32 2147483647, %v294
      %v2467 = vand.u32 %v2466, 8388607
      %v2468 = vor.u32 %v2467, 8388608
      %v2469 = vsub.s32 0, %v2468
      %v2470 = vadd.s32 %v2465, 1
      %vm2471 = vcmp.gt.s32.totalorder %v2470, 0
      %v2472 = vsel %vm2471, %v2470, 0
      %v2473 = vshrl.u32 %v2472, 5
      %v2474 = vand.u32 %v2472, 31
      %v2475 = vsub.s32 32, %v2474
      %v2476 = vshrl.u32 683565275, %v2475
      %v2477 = vshll.u32 683565275, %v2474
      %v2478 = vshrl.u32 2475754826, %v2475
      %v2479 = vor.u32 %v2477, %v2478
      %v2480 = vshll.u32 2475754826, %v2474
      %v2481 = vshrl.u32 2131351028, %v2475
      %v2482 = vor.u32 %v2480, %v2481
      %v2483 = vshll.u32 2131351028, %v2474
      %v2484 = vshrl.u32 2102212464, %v2475
      %v2485 = vor.u32 %v2483, %v2484
      %v2486 = vshll.u32 2102212464, %v2474
      %v2487 = vshrl.u32 920167782, %v2475
      %v2488 = vor.u32 %v2486, %v2487
      %v2489 = vshll.u32 920167782, %v2474
      %v2490 = vshrl.u32 1326507024, %v2475
      %v2491 = vor.u32 %v2489, %v2490
      %vm2492 = vcmp.lt.s32.totalorder %v2473, 1
      %vm2493 = vcmp.lt.s32.totalorder %v2473, 2
      %vm2494 = vcmp.lt.s32.totalorder %v2473, 3
      %vm2495 = vcmp.lt.s32.totalorder %v2473, 4
      %v2496 = vsel %vm2492, %v2476, %v2479
      %v2497 = vsel %vm2495, %v2485, 2102212464
      %v2498 = vsel %vm2494, %v2482, %v2497
      %v2499 = vsel %vm2493, %v2496, %v2498
      %v2500 = vsel %vm2492, %v2479, %v2482
      %v2501 = vsel %vm2495, %v2488, 920167782
      %v2502 = vsel %vm2494, %v2485, %v2501
      %v2503 = vsel %vm2493, %v2500, %v2502
      %v2504 = vsel %vm2492, %v2482, %v2485
      %v2505 = vsel %vm2495, %v2491, 1326507024
      %v2506 = vsel %vm2494, %v2488, %v2505
      %v2507 = vsel %vm2493, %v2504, %v2506
      %v2508 = vshll.u32 %v2468, 8
      %v2509 = vand.u32 %v2508, 65535
      %v2510 = vshrl.u32 %v2508, 16
      %v2511 = vand.u32 %v2507, 65535
      %v2512 = vshrl.u32 %v2507, 16
      %v2513 = vmul.u32 %v2509, %v2511
      %v2514 = vmul.u32 %v2509, %v2512
      %v2515 = vmul.u32 %v2510, %v2511
      %v2516 = vmul.u32 %v2510, %v2512
      %v2517 = vshll.u32 %v2514, 16
      %v2518 = vshrl.u32 %v2514, 16
      %v2519 = vshll.u32 %v2515, 16
      %v2520 = vshrl.u32 %v2515, 16
      %vm2521 = vc.u32 %v2513, %v2517
      %v2522 = vsel %vm2521, 1, 0
      %v2523 = vadd.s32 %v2513, %v2517
      %v2524 = vadd.s32 %v2516, %v2522
      %vm2525 = vc.u32 %v2523, %v2519
      %v2526 = vsel %vm2525, 1, 0
      %v2527 = vadd.s32 %v2523, %v2519
      %v2528 = vadd.s32 %v2524, %v2526
      %v2529 = vadd.s32 %v2528, %v2518
      %v2530 = vadd.s32 %v2529, %v2520
      %v2531 = vand.u32 %v2508, 65535
      %v2532 = vshrl.u32 %v2508, 16
      %v2533 = vand.u32 %v2503, 65535
      %v2534 = vshrl.u32 %v2503, 16
      %v2535 = vmul.u32 %v2531, %v2533
      %v2536 = vmul.u32 %v2531, %v2534
      %v2537 = vmul.u32 %v2532, %v2533
      %v2538 = vmul.u32 %v2532, %v2534
      %v2539 = vshll.u32 %v2536, 16
      %v2540 = vshrl.u32 %v2536, 16
      %v2541 = vshll.u32 %v2537, 16
      %v2542 = vshrl.u32 %v2537, 16
      %vm2543 = vc.u32 %v2535, %v2539
      %v2544 = vsel %vm2543, 1, 0
      %v2545 = vadd.s32 %v2535, %v2539
      %v2546 = vadd.s32 %v2538, %v2544
      %vm2547 = vc.u32 %v2545, %v2541
      %v2548 = vsel %vm2547, 1, 0
      %v2549 = vadd.s32 %v2545, %v2541
      %v2550 = vadd.s32 %v2546, %v2548
      %v2551 = vadd.s32 %v2550, %v2540
      %v2552 = vadd.s32 %v2551, %v2542
      %v2553 = vmul.u32 %v2508, %v2499
      %v2554 = vadd.s32 %v2530, %v2549
      %vm2555 = vc.u32 %v2530, %v2549
      %v2556 = vadd.s32 %v2552, 1
      %v2557 = vsel %vm2555, %v2556, %v2552
      %v2558 = vadd.s32 %v2553, %v2557
      %v2559 = vadd.s32 %v2558, 536870912
      %v2560 = vshrl.u32 %v2559, 30
      %v2561 = vshll.u32 %v2560, 30
      %v2562 = vsub.s32 %v2558, %v2561
      %vm2563 = vcmp.lt.s32.totalorder %v2562, 0
      %v2564 = vsub.s32 0, %v2562
      %v2565 = vsel %vm2563, %v2564, %v2562
      %v2566 = vclz %v2565
      %v2567 = vsub.s32 %v2566, 2
      %vm2568 = vcmp.gt.s32.totalorder 0, %v2567
      %v2569 = vsel %vm2568, 0, %v2567
      %v2570 = vsub.s32 32, %v2569
      %v2571 = vshll.u32 %v2562, %v2569
      %v2572 = vshrl.u32 %v2554, %v2570
      %v2573 = vor.u32 %v2571, %v2572
      %v2574 = vsub.s32 4294967266, %v2569
      %v2575 = vadd.s32 %v2574, 127
      %v2576 = vshll.u32 %v2575, 23
      %v2577 = vor.u32 4788187, %v2576
      %v2578 = vand.u32 2147483647, %v2577
      %v2580 = vcvt.s32.f32 %v2573
      %v2581 = vmul.f32 %v2580, %v2578
      %v2582 = vxor.u32 %v2581, 2147483648
      %v2583 = vsel %vm2462, %v2582, %v2581
      %v2584 = vsub.s32 4, %v2560
      %v2585 = vsel %vm2462, %v2584, %v2560
      %v2586 = vsel %vm2461, %v294, %v2583
      %v2587 = vsel %vm2461, 0, %v2585
      %v2588 = vmul.f32 %v2586, %v2586
      %v2589 = vmul.f32 %v2588, -0.001358992
      %v2590 = vadd.f32 %v2589, 0.041655596
      %v2591 = vmul.f32 %v2588, %v2590
      %v2592 = vadd.f32 %v2591, -0.4999988
      %v2593 = vmul.f32 %v2588, %v2592
      %v2594 = vadd.f32 1.0, %v2593
      %v2595 = vmul.f32 %v2586, %v2586
      %v2596 = vmul.f32 %v2595, -0.00019511016
      %v2597 = vadd.f32 %v2596, 0.008332121
      %v2598 = vmul.f32 %v2595, %v2597
      %v2599 = vadd.f32 %v2598, -0.16666654
      %v2600 = vmul.f32 %v2595, %v2599
      %v2601 = vadd.f32 %v2600, 1.0
      %v2602 = vmul.f32 %v2601, %v2586
      %vm2603 = vweird.f32 %v294
      %v2604 = vand.u32 %v2587, 3
      %vm2605 = vcmp.lt.s32.totalorder %v2604, 2
      %vm2606 = vcmp.eq.s32.totalorder %v2604, 0
      %v2607 = vxor.u32 %v2602, 2147483648
      %v2608 = vsel %vm2606, %v2594, %v2607
      %vm2609 = vcmp.eq.s32.totalorder %v2604, 2
      %v2610 = vxor.u32 %v2594, 2147483648
      %v2611 = vsel %vm2609, %v2610, %v2602
      %v2612 = vsel %vm2605, %v2608, %v2611
      %v2613 = vsel %vm2603, nan, %v2612
      %v2614 = vand.u32 2147483647, %v295
      %vm2615 = vcmp.le.f32.partialorder %v2614, 0.7853982
      %vm2616 = vcmp.lt.s32.totalorder %v295, 0
      %v2617 = vand.u32 %v295, 2139095040
      %v2618 = vshrl.u32 %v2617, 23
      %v2619 = vsub.s32 %v2618, 127
      %v2620 = vand.u32 2147483647, %v295
      %v2621 = vand.u32 %v2620, 8388607
      %v2622 = vor.u32 %v2621, 8388608
      %v2623 = vsub.s32 0, %v2622
      %v2624 = vadd.s32 %v2619, 1
      %vm2625 = vcmp.gt.s32.totalorder %v2624, 0
      %v2626 = vsel %vm2625, %v2624, 0
      %v2627 = vshrl.u32 %v2626, 5
      %v2628 = vand.u32 %v2626, 31
      %v2629 = vsub.s32 32, %v2628
      %v2630 = vshrl.u32 683565275, %v2629
      %v2631 = vshll.u32 683565275, %v2628
      %v2632 = vshrl.u32 2475754826, %v2629
      %v2633 = vor.u32 %v2631, %v2632
      %v2634 = vshll.u32 2475754826, %v2628
      %v2635 = vshrl.u32 2131351028, %v2629
      %v2636 = vor.u32 %v2634, %v2635
      %v2637 = vshll.u32 2131351028, %v2628
      %v2638 = vshrl.u32 2102212464, %v2629
      %v2639 = vor.u32 %v2637, %v2638
      %v2640 = vshll.u32 2102212464, %v2628
      %v2641 = vshrl.u32 920167782, %v2629
      %v2642 = vor.u32 %v2640, %v2641
      %v2643 = vshll.u32 920167782, %v2628
      %v2644 = vshrl.u32 1326507024, %v2629
      %v2645 = vor.u32 %v2643, %v2644
      %vm2646 = vcmp.lt.s32.totalorder %v2627, 1
      %vm2647 = vcmp.lt.s32.totalorder %v2627, 2
      %vm2648 = vcmp.lt.s32.totalorder %v2627, 3
      %vm2649 = vcmp.lt.s32.totalorder %v2627, 4
      %v2650 = vsel %vm2646, %v2630, %v2633
      %v2651 = vsel %vm2649, %v2639, 2102212464
      %v2652 = vsel %vm2648, %v2636, %v2651
      %v2653 = vsel %vm2647, %v2650, %v2652
      %v2654 = vsel %vm2646, %v2633, %v2636
      %v2655 = vsel %vm2649, %v2642, 920167782
      %v2656 = vsel %vm2648, %v2639, %v2655
      %v2657 = vsel %vm2647, %v2654, %v2656
      %v2658 = vsel %vm2646, %v2636, %v2639
      %v2659 = vsel %vm2649, %v2645, 1326507024
      %v2660 = vsel %vm2648, %v2642, %v2659
      %v2661 = vsel %vm2647, %v2658, %v2660
      %v2662 = vshll.u32 %v2622, 8
      %v2663 = vand.u32 %v2662, 65535
      %v2664 = vshrl.u32 %v2662, 16
      %v2665 = vand.u32 %v2661, 65535
      %v2666 = vshrl.u32 %v2661, 16
      %v2667 = vmul.u32 %v2663, %v2665
      %v2668 = vmul.u32 %v2663, %v2666
      %v2669 = vmul.u32 %v2664, %v2665
      %v2670 = vmul.u32 %v2664, %v2666
      %v2671 = vshll.u32 %v2668, 16
      %v2672 = vshrl.u32 %v2668, 16
      %v2673 = vshll.u32 %v2669, 16
      %v2674 = vshrl.u32 %v2669, 16
      %vm2675 = vc.u32 %v2667, %v2671
      %v2676 = vsel %vm2675, 1, 0
      %v2677 = vadd.s32 %v2667, %v2671
      %v2678 = vadd.s32 %v2670, %v2676
      %vm2679 = vc.u32 %v2677, %v2673
      %v2680 = vsel %vm2679, 1, 0
      %v2681 = vadd.s32 %v2677, %v2673
      %v2682 = vadd.s32 %v2678, %v2680
      %v2683 = vadd.s32 %v2682, %v2672
      %v2684 = vadd.s32 %v2683, %v2674
      %v2685 = vand.u32 %v2662, 65535
      %v2686 = vshrl.u32 %v2662, 16
      %v2687 = vand.u32 %v2657, 65535
      %v2688 = vshrl.u32 %v2657, 16
      %v2689 = vmul.u32 %v2685, %v2687
      %v2690 = vmul.u32 %v2685, %v2688
      %v2691 = vmul.u32 %v2686, %v2687
      %v2692 = vmul.u32 %v2686, %v2688
      %v2693 = vshll.u32 %v2690, 16
      %v2694 = vshrl.u32 %v2690, 16
      %v2695 = vshll.u32 %v2691, 16
      %v2696 = vshrl.u32 %v2691, 16
      %vm2697 = vc.u32 %v2689, %v2693
      %v2698 = vsel %vm2697, 1, 0
      %v2699 = vadd.s32 %v2689, %v2693
      %v2700 = vadd.s32 %v2692, %v2698
      %vm2701 = vc.u32 %v2699, %v2695
      %v2702 = vsel %vm2701, 1, 0
      %v2703 = vadd.s32 %v2699, %v2695
      %v2704 = vadd.s32 %v2700, %v2702
      %v2705 = vadd.s32 %v2704, %v2694
      %v2706 = vadd.s32 %v2705, %v2696
      %v2707 = vmul.u32 %v2662, %v2653
      %v2708 = vadd.s32 %v2684, %v2703
      %vm2709 = vc.u32 %v2684, %v2703
      %v2710 = vadd.s32 %v2706, 1
      %v2711 = vsel %vm2709, %v2710, %v2706
      %v2712 = vadd.s32 %v2707, %v2711
      %v2713 = vadd.s32 %v2712, 536870912
      %v2714 = vshrl.u32 %v2713, 30
      %v2715 = vshll.u32 %v2714, 30
      %v2716 = vsub.s32 %v2712, %v2715
      %vm2717 = vcmp.lt.s32.totalorder %v2716, 0
      %v2718 = vsub.s32 0, %v2716
      %v2719 = vsel %vm2717, %v2718, %v2716
      %v2720 = vclz %v2719
      %v2721 = vsub.s32 %v2720, 2
      %vm2722 = vcmp.gt.s32.totalorder 0, %v2721
      %v2723 = vsel %vm2722, 0, %v2721
      %v2724 = vsub.s32 32, %v2723
      %v2725 = vshll.u32 %v2716, %v2723
      %v2726 = vshrl.u32 %v2708, %v2724
      %v2727 = vor.u32 %v2725, %v2726
      %v2728 = vsub.s32 4294967266, %v2723
      %v2729 = vadd.s32 %v2728, 127
      %v2730 = vshll.u32 %v2729, 23
      %v2731 = vor.u32 4788187, %v2730
      %v2732 = vand.u32 2147483647, %v2731
      %v2734 = vcvt.s32.f32 %v2727
      %v2735 = vmul.f32 %v2734, %v2732
      %v2736 = vxor.u32 %v2735, 2147483648
      %v2737 = vsel %vm2616, %v2736, %v2735
      %v2738 = vsub.s32 4, %v2714
      %v2739 = vsel %vm2616, %v2738, %v2714
      %v2740 = vsel %vm2615, %v295, %v2737
      %v2741 = vsel %vm2615, 0, %v2739
      %v2742 = vmul.f32 %v2740, %v2740
      %v2743 = vmul.f32 %v2742, -0.001358992
      %v2744 = vadd.f32 %v2743, 0.041655596
      %v2745 = vmul.f32 %v2742, %v2744
      %v2746 = vadd.f32 %v2745, -0.4999988
      %v2747 = vmul.f32 %v2742, %v2746
      %v2748 = vadd.f32 1.0, %v2747
      %v2749 = vmul.f32 %v2740, %v2740
      %v2750 = vmul.f32 %v2749, -0.00019511016
      %v2751 = vadd.f32 %v2750, 0.008332121
      %v2752 = vmul.f32 %v2749, %v2751
      %v2753 = vadd.f32 %v2752, -0.16666654
      %v2754 = vmul.f32 %v2749, %v2753
      %v2755 = vadd.f32 %v2754, 1.0
      %v2756 = vmul.f32 %v2755, %v2740
      %vm2757 = vweird.f32 %v295
      %v2758 = vand.u32 %v2741, 3
      %vm2759 = vcmp.lt.s32.totalorder %v2758, 2
      %vm2760 = vcmp.eq.s32.totalorder %v2758, 0
      %v2761 = vxor.u32 %v2756, 2147483648
      %v2762 = vsel %vm2760, %v2748, %v2761
      %vm2763 = vcmp.eq.s32.totalorder %v2758, 2
      %v2764 = vxor.u32 %v2748, 2147483648
      %v2765 = vsel %vm2763, %v2764, %v2756
      %v2766 = vsel %vm2759, %v2762, %v2765
      %v2767 = vsel %vm2757, nan, %v2766
      %v2768 = vld [vmem:[%s2] sm:$0xff]
      %v2769 = vld [vmem:[%s3] sm:$0xff]
      %vm2770 = vcmask 64512
      %v2772 = vsel %vm2770, %v1689, 0
      %v2775 = vsel %vm2770, %v1843, 0
      %v2778 = vsel %vm2770, %v1997, 0
      %v2781 = vsel %vm2770, %v2151, 0
      %v2784 = vsel %vm2770, %v2305, 0
      %v2787 = vsel %vm2770, %v2459, 0
      %v2790 = vsel %vm2770, %v2613, 0
      %v2793 = vsel %vm2770, %v2767, 0
      %2795 = vmatpush.msra.mxu0 0.0
      %2796 = vmatpush.msra.mxu0 0.0
      %2797 = vmatpush.msra.mxu0 0.0
      %2798 = vmatpush.msra.mxu0 0.0
      %2799 = vmatpush.msra.mxu0 0.0
      %2800 = vmatpush.msra.mxu0 0.0
      %2801 = vmatpush.msra.mxu0 0.0
      %2802 = vmatpush.msra.mxu0 0.0
      %2803 = vmatpush.msra.mxu0 0.0
      %2804 = vmatpush.msra.mxu0 0.0
      %2805 = vmatpush.msra.mxu0 0.0
      %2806 = vmatpush.msra.mxu0 0.0
      %2807 = vmatpush.msra.mxu0 0.0
      %2808 = vmatpush.msra.mxu0 0.0
      %2809 = vmatpush.msra.mxu0 0.0
      %2810 = vmatpush.msra.mxu0 %v2769
      %2811 = vmatmul.f32.gmra.mxu0 %v2772
      %v2812 = vpop.f32.mrf.mxu0
      %v2813 = vadd.f32 0.0, %v2812
      %2814 = vmatmul.f32.gmra.mxu0 %v2775
      %v2815 = vpop.f32.mrf.mxu0
      %v2816 = vadd.f32 0.0, %v2815
      %2817 = vmatmul.f32.gmra.mxu0 %v2778
      %v2818 = vpop.f32.mrf.mxu0
      %v2819 = vadd.f32 0.0, %v2818
      %2820 = vmatmul.f32.gmra.mxu0 %v2781
      %v2821 = vpop.f32.mrf.mxu0
      %v2822 = vadd.f32 0.0, %v2821
      %2823 = vmatmul.f32.gmra.mxu0 %v2784
      %v2824 = vpop.f32.mrf.mxu0
      %v2825 = vadd.f32 0.0, %v2824
      %2826 = vmatmul.f32.gmra.mxu0 %v2787
      %v2827 = vpop.f32.mrf.mxu0
      %v2828 = vadd.f32 0.0, %v2827
      %2829 = vmatmul.f32.gmra.mxu0 %v2790
      %v2830 = vpop.f32.mrf.mxu0
      %v2831 = vadd.f32 0.0, %v2830
      %2832 = vmatmul.f32.gmra.mxu0 %v2793
      %v2833 = vpop.f32.mrf.mxu0
      %v2834 = vadd.f32 0.0, %v2833
      %2835 = vdwg.mxu0
      %v2837 = vsel %vm2770, %v450, 0
      %v2840 = vsel %vm2770, %v605, 0
      %v2843 = vsel %vm2770, %v760, 0
      %v2846 = vsel %vm2770, %v915, 0
      %v2849 = vsel %vm2770, %v1070, 0
      %v2852 = vsel %vm2770, %v1225, 0
      %v2855 = vsel %vm2770, %v1380, 0
      %v2858 = vsel %vm2770, %v1535, 0
      %2860 = vmatpush.msra.mxu0 0.0
      %2861 = vmatpush.msra.mxu0 0.0
      %2862 = vmatpush.msra.mxu0 0.0
      %2863 = vmatpush.msra.mxu0 0.0
      %2864 = vmatpush.msra.mxu0 0.0
      %2865 = vmatpush.msra.mxu0 0.0
      %2866 = vmatpush.msra.mxu0 0.0
      %2867 = vmatpush.msra.mxu0 0.0
      %2868 = vmatpush.msra.mxu0 0.0
      %2869 = vmatpush.msra.mxu0 0.0
      %2870 = vmatpush.msra.mxu0 0.0
      %2871 = vmatpush.msra.mxu0 0.0
      %2872 = vmatpush.msra.mxu0 0.0
      %2873 = vmatpush.msra.mxu0 0.0
      %2874 = vmatpush.msra.mxu0 0.0
      %2875 = vmatpush.msra.mxu0 %v2768
      %2876 = vmatmul.f32.gmra.mxu0 %v2837
      %v2877 = vpop.f32.mrf.mxu0
      %v2878 = vadd.f32 %v2813, %v2877
      %2879 = vmatmul.f32.gmra.mxu0 %v2840
      %v2880 = vpop.f32.mrf.mxu0
      %v2881 = vadd.f32 %v2816, %v2880
      %2882 = vmatmul.f32.gmra.mxu0 %v2843
      %v2883 = vpop.f32.mrf.mxu0
      %v2884 = vadd.f32 %v2819, %v2883
      %2885 = vmatmul.f32.gmra.mxu0 %v2846
      %v2886 = vpop.f32.mrf.mxu0
      %v2887 = vadd.f32 %v2822, %v2886
      %2888 = vmatmul.f32.gmra.mxu0 %v2849
      %v2889 = vpop.f32.mrf.mxu0
      %v2890 = vadd.f32 %v2825, %v2889
      %2891 = vmatmul.f32.gmra.mxu0 %v2852
      %v2892 = vpop.f32.mrf.mxu0
      %v2893 = vadd.f32 %v2828, %v2892
      %2894 = vmatmul.f32.gmra.mxu0 %v2855
      %v2895 = vpop.f32.mrf.mxu0
      %v2896 = vadd.f32 %v2831, %v2895
      %2897 = vmatmul.f32.gmra.mxu0 %v2858
      %v2898 = vpop.f32.mrf.mxu0
      %v2899 = vadd.f32 %v2834, %v2898
      %2900 = vdwg.mxu0
      %v2901 = vld [vmem:[%s4] sm:$0x1]
      %v2903 = vperm.slane %v2901, 0
      %v2905 = vadd.f32 %v2878, %v2903
      %v2906 = vadd.f32 %v2881, %v2903
      %v2907 = vadd.f32 %v2884, %v2903
      %v2908 = vadd.f32 %v2887, %v2903
      %v2909 = vadd.f32 %v2890, %v2903
      %v2910 = vadd.f32 %v2893, %v2903
      %v2911 = vadd.f32 %v2896, %v2903
      %v2912 = vadd.f32 %v2899, %v2903
      %vm2913 = vcmask 261120
      %2914 = vst.msk [vmem:[%s226] sm:$0xff] %vm2913, %v2905
      %2915 = vst.msk [vmem:[%s226 + $0x8] sm:$0xff] %vm2913, %v2906
      %2916 = vst.msk [vmem:[%s226 + $0x10] sm:$0xff] %vm2913, %v2907
      %2917 = vst.msk [vmem:[%s226 + $0x18] sm:$0xff] %vm2913, %v2908
      %2918 = vst.msk [vmem:[%s226 + $0x20] sm:$0xff] %vm2913, %v2909
      %2919 = vst.msk [vmem:[%s226 + $0x28] sm:$0xff] %vm2913, %v2910
      %2920 = vst.msk [vmem:[%s226 + $0x30] sm:$0xff] %vm2913, %v2911
      %2921 = vst.msk [vmem:[%s226 + $0x38] sm:$0xff] %vm2913, %v2912
      %s2922 = smul.u32 8, %s16
      %p2923 = scmp.lt.s32.totalorder %s2922, 15
      %s2924 = scalar_select %p2923, %s2922, 15
      %s2925 = smul.addr %s2924, 8
      %s2926 = scalar_lea.vmem %s5, %s2925
      // Predicated region
      $region41: #{tpu_custom_call.1} parent=39 // pred_check
        %p2927 = pneg %p144
      $region42: #{tpu_custom_call.1} parent=39 // pred_check_branch
        %2929 = sbr.rel (%p2927) target = $region44
      $region43: #{tpu_custom_call.1} parent=39 // pred_region
        %s2930 = smul.u32 8, %s16
      $region44: #{tpu_custom_call.1} parent=39 // pred_fallthru
        _
    $region40: #{tpu_custom_call.1} parent=5 // pred_fallthru
      _
    %p2931 = scmp.le.s32.totalorder 2, %s11
    // Predicated region
    $region45: #{tpu_custom_call.1} parent=5 // pred_check
      %p2932 = pneg %p2931
    $region46: #{tpu_custom_call.1} parent=5 // pred_check_branch
      %2934 = sbr.rel (%p2932) target = $region48
    $region47: #{tpu_custom_call.1} parent=5 // pred_region
      %s2935 = ssub.s32 %s11, 2
      // Predicated region
      $region49: #{tpu_custom_call.1} parent=47 // pred_check
        %p2936 = pneg %p150
      $region50: #{tpu_custom_call.1} parent=47 // pred_check_branch
        %2938 = sbr.rel (%p2936) target = $region52
      $region51: #{tpu_custom_call.1} parent=47 // pred_region
        %s2939 = smul.u32 8, %s17
        %p2940 = scmp.lt.s32.totalorder %s2939, 15
        %s2941 = scalar_select %p2940, %s2939, 15
        %s2942 = smul.addr %s2941, 8
        %s2943 = scalar_lea.vmem %s5, %s2942
      $region52: #{tpu_custom_call.1} parent=47 // pred_fallthru
        _
    $region48: #{tpu_custom_call.1} parent=5 // pred_fallthru
      _
  $region6: #{tpu_custom_call.1} parent=0 // loop_footer
    %s15 = sadd.s32 1, %s11
  $region7: #{tpu_custom_call.1} parent=0 // loop_footer_branch
    %10 = sbr.rel target = $region3
  $region8: #{tpu_custom_call.1} parent=0 // loop_exit
    _

</llo_original>
